<compile_context>
chip_gen: v6e
topology: v6e:2x2x1
jax: 0.10.0
libtpu: 0.0.40
codegen_flags: <defaults>
</compile_context>

<pallas_src>
import functools
import math

import jax
import jax.numpy as jnp
from jax.experimental import pallas as pl
from jax.experimental.pallas import tpu as pltpu

IN_DIM = 4
HID = 50
OUT_DIM = 80
N_LAYERS = 7
PAD_IN = 56  # max fan-in (50) rounded up to a multiple of 8

# (fan_in, fan_out) per layer, PyTorch order.
_LAYER_DIMS = ((IN_DIM, HID), (HID, HID), (HID, HID), (HID, HID),
               (HID, HID), (HID, HID), (HID, OUT_DIM))

_FLOPS_PER_ROW = 2 * sum(fi * fo for fi, fo in _LAYER_DIMS)       # ~33.4 KFLOP
_TRANS_PER_ROW = sum(fo for (_, fo) in _LAYER_DIMS[:-1])          # 300 tanh/exp


def _elu(x):
    # PyTorch F.elu (alpha=1): x if x > 0 else exp(x) - 1.
    # Clamp the exp input via a select (no extra min) to avoid overflow.
    safe = jnp.where(x > 0, 0.0, x)
    return jnp.where(x > 0, x, jnp.exp(safe) - 1.0)


_ACTS = (jnp.tanh, _elu, jnp.tanh, _elu, jnp.tanh, _elu, None)


def _mlp_kernel(x_ref, w_ref, b_ref, o_ref):
    # x_ref: (IN_DIM, bn)           batch on lanes (lane-dense)
    # w_ref: (7, OUT_DIM, PAD_IN)   zero-padded weight stack, W[l] is (out, in)
    # b_ref: (7, OUT_DIM, 1)        zero-padded bias stack
    # o_ref: (OUT_DIM, bn)
    h = x_ref[...]  # (4, bn) f32
    for layer, ((fin, fout), act) in enumerate(zip(_LAYER_DIMS, _ACTS)):
        w = w_ref[layer][:fout, :fin]        # static slice of resident weights
        b = b_ref[layer][:fout, :]           # (fout, 1) -> lane broadcast
        h = jnp.dot(w, h, preferred_element_type=jnp.float32) + b
        if act is not None:
            h = act(h)
    o_ref[...] = h.astype(o_ref.dtype)       # (80, bn) lane-dense store


@functools.partial(jax.jit, static_argnames=("block_n",))
def condensation_net_2_by_2(x, w_stack, b_stack, block_n=256):
    """Forward pass.  x: (N, 4) float32.  Returns (N, 80) float32."""
    assert block_n % 128 == 0, "block_n must be a multiple of 128 (lane dim)"
    n = x.shape[0]
    n_pad = -(-n // block_n) * block_n        # ceil to multiple of block_n

    xt = x.T.astype(jnp.float32)              # (4, N) -- batch on lanes
    if n_pad != n:
        xt = jnp.pad(xt, ((0, 0), (0, n_pad - n)))

    grid = (n_pad // block_n,)

    cost = pl.CostEstimate(
        flops=n_pad * _FLOPS_PER_ROW,
        transcendentals=n_pad * _TRANS_PER_ROW,
        bytes_accessed=n_pad * (IN_DIM + OUT_DIM) * 4
        + int(w_stack.size + b_stack.size) * 4,
    )

    yt = pl.pallas_call(
        _mlp_kernel,
        out_shape=jax.ShapeDtypeStruct((OUT_DIM, n_pad), jnp.float32),
        grid_spec=pltpu.PrefetchScalarGridSpec(
            num_scalar_prefetch=0,
            grid=grid,
            in_specs=[
                pl.BlockSpec((IN_DIM, block_n), lambda i: (0, i)),
                # whole weight/bias stacks resident; constant block index ->
                # DMA'd once, not re-fetched per grid step.
                pl.BlockSpec(w_stack.shape, lambda i: (0, 0, 0)),
                pl.BlockSpec(b_stack.shape, lambda i: (0, 0, 0)),
            ],
            out_specs=pl.BlockSpec((OUT_DIM, block_n), lambda i: (0, i)),
        ),
        compiler_params=pltpu.CompilerParams(
            dimension_semantics=("parallel",),
            vmem_limit_bytes=16 * 1024 * 1024,
        ),
        cost_estimate=cost,
    )(xt, w_stack, b_stack)

    return yt[:, :n].T                        # back to (N, 80)


def init_params(key):
    """PyTorch nn.Linear default init: uniform(-1/sqrt(fan_in), 1/sqrt(fan_in)).
    Weights kept in PyTorch (out, in) layout; biases (out,)."""
    params = []
    for fin, fout in _LAYER_DIMS:
        key, kw, kb = jax.random.split(key, 3)
        bound = 1.0 / math.sqrt(float(fin))
        w = jax.random.uniform(kw, (fout, fin), jnp.float32, -bound, bound)
        b = jax.random.uniform(kb, (fout,), jnp.float32, -bound, bound)
        params.append((w, b))
    return params


def pack_params(params):
    """Pack per-layer (out,in) weights / (out,) biases into zero-padded stacks."""
    w_stack = jnp.zeros((N_LAYERS, OUT_DIM, PAD_IN), jnp.float32)
    b_stack = jnp.zeros((N_LAYERS, OUT_DIM, 1), jnp.float32)
    for l, (w, b) in enumerate(params):
        fout, fin = w.shape
        w_stack = w_stack.at[l, :fout, :fin].set(w)
        b_stack = b_stack.at[l, :fout, 0].set(b)
    return w_stack, b_stack


def reference_forward(x, params):
    """Plain-JAX reference mirroring the PyTorch forward (x @ W.T + b)."""
    h = x
    for (w, b), act in zip(params, _ACTS):
        h = h @ w.T + b
        if act is not None:
            h = act(h)
    return h


if __name__ == "__main__":
    key = jax.random.PRNGKey(0)
    kp, kx = jax.random.split(key)

    params = init_params(kp)
    w_stack, b_stack = pack_params(params)

    N = 512  # small batch of 4-dim feature vectors; grid = 2 steps @ block_n=256
    x = jax.random.normal(kx, (N, IN_DIM), dtype=jnp.float32)

    y = condensation_net_2_by_2(x, w_stack, b_stack, block_n=256)
    y = jax.block_until_ready(y)

    y_ref = reference_forward(x, params)
    assert y.shape == (N, OUT_DIM)
    max_err = float(jnp.max(jnp.abs(y - y_ref)))
    assert jnp.allclose(y, y_ref, atol=2e-4, rtol=2e-4), max_err

    print("KERNEL_OK")
</pallas_src>

<mosaic_0001>
module attributes {stable_mosaic.version = 11 : i64} {
  func.func @_mlp_kernel(%arg0: i32, %arg1: memref<4x256xf32, #tpu.memory_space<vmem>>, %arg2: memref<7x80x56xf32, #tpu.memory_space<vmem>>, %arg3: memref<7x80x1xf32, #tpu.memory_space<vmem>>, %arg4: memref<80x256xf32, #tpu.memory_space<vmem>>) attributes {dimension_semantics = [#tpu.dimension_semantics<parallel>], iteration_bounds = array<i64: 2>, scalar_prefetch = 0 : i64, scratch_operands = 0 : i64, tpu.core_type = #tpu.core_type<tc>, window_params = [{transform_indices = @transform_0, window_bounds = array<i64: 4, 256>}, {pipeline_mode = #tpu.pipeline_mode<synchronous>, transform_indices = @transform_1, window_bounds = array<i64: 7, 80, 56>}, {pipeline_mode = #tpu.pipeline_mode<synchronous>, transform_indices = @transform_2, window_bounds = array<i64: 7, 80, 1>}, {transform_indices = @transform_3, window_bounds = array<i64: 80, 256>}]} {
    %c0 = arith.constant 0 : index
    %c0_0 = arith.constant 0 : index
    %0 = vector.load %arg1[%c0, %c0_0] : memref<4x256xf32, #tpu.memory_space<vmem>>, vector<4x256xf32>
    %c0_1 = arith.constant 0 : index
    %c0_2 = arith.constant 0 : index
    %c0_3 = arith.constant 0 : index
    %1 = vector.load %arg2[%c0_1, %c0_2, %c0_3] : memref<7x80x56xf32, #tpu.memory_space<vmem>>, vector<1x80x56xf32>
    %2 = vector.shape_cast %1 : vector<1x80x56xf32> to vector<80x56xf32>
    %3 = vector.extract_strided_slice %2 {offsets = [0, 0], sizes = [50, 4], strides = [1, 1]} : vector<80x56xf32> to vector<50x4xf32>
    %c0_4 = arith.constant 0 : index
    %c0_5 = arith.constant 0 : index
    %c0_6 = arith.constant 0 : index
    %4 = vector.load %arg3[%c0_4, %c0_5, %c0_6] : memref<7x80x1xf32, #tpu.memory_space<vmem>>, vector<1x80x1xf32>
    %5 = vector.shape_cast %4 : vector<1x80x1xf32> to vector<80x1xf32>
    %6 = vector.extract_strided_slice %5 {offsets = [0, 0], sizes = [50, 1], strides = [1, 1]} : vector<80x1xf32> to vector<50x1xf32>
    %cst = arith.constant dense<0.000000e+00> : vector<50x256xf32>
    %7 = tpu.matmul %3, %0, %cst {dimension_numbers = #tpu.dot_dimension_numbers<[1], [0], [0], [1], [0, 0, 1, 1], [], []>} : vector<50x4xf32>, vector<4x256xf32>, vector<50x256xf32> -> vector<50x256xf32>
    %8 = vector.broadcast %6 : vector<50x1xf32> to vector<50x256xf32>
    %9 = arith.addf %7, %8 : vector<50x256xf32>
    %10 = math.tanh %9 : vector<50x256xf32>
    %c1 = arith.constant 1 : index
    %c0_7 = arith.constant 0 : index
    %c0_8 = arith.constant 0 : index
    %11 = vector.load %arg2[%c1, %c0_7, %c0_8] : memref<7x80x56xf32, #tpu.memory_space<vmem>>, vector<1x80x56xf32>
    %12 = vector.shape_cast %11 : vector<1x80x56xf32> to vector<80x56xf32>
    %13 = vector.extract_strided_slice %12 {offsets = [0, 0], sizes = [50, 50], strides = [1, 1]} : vector<80x56xf32> to vector<50x50xf32>
    %c1_9 = arith.constant 1 : index
    %c0_10 = arith.constant 0 : index
    %c0_11 = arith.constant 0 : index
    %14 = vector.load %arg3[%c1_9, %c0_10, %c0_11] : memref<7x80x1xf32, #tpu.memory_space<vmem>>, vector<1x80x1xf32>
    %15 = vector.shape_cast %14 : vector<1x80x1xf32> to vector<80x1xf32>
    %16 = vector.extract_strided_slice %15 {offsets = [0, 0], sizes = [50, 1], strides = [1, 1]} : vector<80x1xf32> to vector<50x1xf32>
    %cst_12 = arith.constant dense<0.000000e+00> : vector<50x256xf32>
    %17 = tpu.matmul %13, %10, %cst_12 {dimension_numbers = #tpu.dot_dimension_numbers<[1], [0], [0], [1], [0, 0, 1, 1], [], []>} : vector<50x50xf32>, vector<50x256xf32>, vector<50x256xf32> -> vector<50x256xf32>
    %18 = vector.broadcast %16 : vector<50x1xf32> to vector<50x256xf32>
    %19 = arith.addf %17, %18 : vector<50x256xf32>
    %cst_13 = arith.constant 0.000000e+00 : f32
    %20 = vector.broadcast %cst_13 : f32 to vector<50x256xf32>
    %21 = arith.cmpf ogt, %19, %20 : vector<50x256xf32>
    %cst_14 = arith.constant 0.000000e+00 : f32
    %22 = vector.broadcast %cst_14 : f32 to vector<50x256xf32>
    %23 = arith.select %21, %22, %19 : vector<50x256xi1>, vector<50x256xf32>
    %cst_15 = arith.constant 0.000000e+00 : f32
    %24 = vector.broadcast %cst_15 : f32 to vector<50x256xf32>
    %25 = arith.cmpf ogt, %19, %24 : vector<50x256xf32>
    %26 = math.exp %23 : vector<50x256xf32>
    %cst_16 = arith.constant 1.000000e+00 : f32
    %27 = vector.broadcast %cst_16 : f32 to vector<50x256xf32>
    %28 = arith.subf %26, %27 : vector<50x256xf32>
    %29 = arith.select %25, %19, %28 : vector<50x256xi1>, vector<50x256xf32>
    %c2 = arith.constant 2 : index
    %c0_17 = arith.constant 0 : index
    %c0_18 = arith.constant 0 : index
    %30 = vector.load %arg2[%c2, %c0_17, %c0_18] : memref<7x80x56xf32, #tpu.memory_space<vmem>>, vector<1x80x56xf32>
    %31 = vector.shape_cast %30 : vector<1x80x56xf32> to vector<80x56xf32>
    %32 = vector.extract_strided_slice %31 {offsets = [0, 0], sizes = [50, 50], strides = [1, 1]} : vector<80x56xf32> to vector<50x50xf32>
    %c2_19 = arith.constant 2 : index
    %c0_20 = arith.constant 0 : index
    %c0_21 = arith.constant 0 : index
    %33 = vector.load %arg3[%c2_19, %c0_20, %c0_21] : memref<7x80x1xf32, #tpu.memory_space<vmem>>, vector<1x80x1xf32>
    %34 = vector.shape_cast %33 : vector<1x80x1xf32> to vector<80x1xf32>
    %35 = vector.extract_strided_slice %34 {offsets = [0, 0], sizes = [50, 1], strides = [1, 1]} : vector<80x1xf32> to vector<50x1xf32>
    %cst_22 = arith.constant dense<0.000000e+00> : vector<50x256xf32>
    %36 = tpu.matmul %32, %29, %cst_22 {dimension_numbers = #tpu.dot_dimension_numbers<[1], [0], [0], [1], [0, 0, 1, 1], [], []>} : vector<50x50xf32>, vector<50x256xf32>, vector<50x256xf32> -> vector<50x256xf32>
    %37 = vector.broadcast %35 : vector<50x1xf32> to vector<50x256xf32>
    %38 = arith.addf %36, %37 : vector<50x256xf32>
    %39 = math.tanh %38 : vector<50x256xf32>
    %c3 = arith.constant 3 : index
    %c0_23 = arith.constant 0 : index
    %c0_24 = arith.constant 0 : index
    %40 = vector.load %arg2[%c3, %c0_23, %c0_24] : memref<7x80x56xf32, #tpu.memory_space<vmem>>, vector<1x80x56xf32>
    %41 = vector.shape_cast %40 : vector<1x80x56xf32> to vector<80x56xf32>
    %42 = vector.extract_strided_slice %41 {offsets = [0, 0], sizes = [50, 50], strides = [1, 1]} : vector<80x56xf32> to vector<50x50xf32>
    %c3_25 = arith.constant 3 : index
    %c0_26 = arith.constant 0 : index
    %c0_27 = arith.constant 0 : index
    %43 = vector.load %arg3[%c3_25, %c0_26, %c0_27] : memref<7x80x1xf32, #tpu.memory_space<vmem>>, vector<1x80x1xf32>
    %44 = vector.shape_cast %43 : vector<1x80x1xf32> to vector<80x1xf32>
    %45 = vector.extract_strided_slice %44 {offsets = [0, 0], sizes = [50, 1], strides = [1, 1]} : vector<80x1xf32> to vector<50x1xf32>
    %cst_28 = arith.constant dense<0.000000e+00> : vector<50x256xf32>
    %46 = tpu.matmul %42, %39, %cst_28 {dimension_numbers = #tpu.dot_dimension_numbers<[1], [0], [0], [1], [0, 0, 1, 1], [], []>} : vector<50x50xf32>, vector<50x256xf32>, vector<50x256xf32> -> vector<50x256xf32>
    %47 = vector.broadcast %45 : vector<50x1xf32> to vector<50x256xf32>
    %48 = arith.addf %46, %47 : vector<50x256xf32>
    %cst_29 = arith.constant 0.000000e+00 : f32
    %49 = vector.broadcast %cst_29 : f32 to vector<50x256xf32>
    %50 = arith.cmpf ogt, %48, %49 : vector<50x256xf32>
    %cst_30 = arith.constant 0.000000e+00 : f32
    %51 = vector.broadcast %cst_30 : f32 to vector<50x256xf32>
    %52 = arith.select %50, %51, %48 : vector<50x256xi1>, vector<50x256xf32>
    %cst_31 = arith.constant 0.000000e+00 : f32
    %53 = vector.broadcast %cst_31 : f32 to vector<50x256xf32>
    %54 = arith.cmpf ogt, %48, %53 : vector<50x256xf32>
    %55 = math.exp %52 : vector<50x256xf32>
    %cst_32 = arith.constant 1.000000e+00 : f32
    %56 = vector.broadcast %cst_32 : f32 to vector<50x256xf32>
    %57 = arith.subf %55, %56 : vector<50x256xf32>
    %58 = arith.select %54, %48, %57 : vector<50x256xi1>, vector<50x256xf32>
    %c4 = arith.constant 4 : index
    %c0_33 = arith.constant 0 : index
    %c0_34 = arith.constant 0 : index
    %59 = vector.load %arg2[%c4, %c0_33, %c0_34] : memref<7x80x56xf32, #tpu.memory_space<vmem>>, vector<1x80x56xf32>
    %60 = vector.shape_cast %59 : vector<1x80x56xf32> to vector<80x56xf32>
    %61 = vector.extract_strided_slice %60 {offsets = [0, 0], sizes = [50, 50], strides = [1, 1]} : vector<80x56xf32> to vector<50x50xf32>
    %c4_35 = arith.constant 4 : index
    %c0_36 = arith.constant 0 : index
    %c0_37 = arith.constant 0 : index
    %62 = vector.load %arg3[%c4_35, %c0_36, %c0_37] : memref<7x80x1xf32, #tpu.memory_space<vmem>>, vector<1x80x1xf32>
    %63 = vector.shape_cast %62 : vector<1x80x1xf32> to vector<80x1xf32>
    %64 = vector.extract_strided_slice %63 {offsets = [0, 0], sizes = [50, 1], strides = [1, 1]} : vector<80x1xf32> to vector<50x1xf32>
    %cst_38 = arith.constant dense<0.000000e+00> : vector<50x256xf32>
    %65 = tpu.matmul %61, %58, %cst_38 {dimension_numbers = #tpu.dot_dimension_numbers<[1], [0], [0], [1], [0, 0, 1, 1], [], []>} : vector<50x50xf32>, vector<50x256xf32>, vector<50x256xf32> -> vector<50x256xf32>
    %66 = vector.broadcast %64 : vector<50x1xf32> to vector<50x256xf32>
    %67 = arith.addf %65, %66 : vector<50x256xf32>
    %68 = math.tanh %67 : vector<50x256xf32>
    %c5 = arith.constant 5 : index
    %c0_39 = arith.constant 0 : index
    %c0_40 = arith.constant 0 : index
    %69 = vector.load %arg2[%c5, %c0_39, %c0_40] : memref<7x80x56xf32, #tpu.memory_space<vmem>>, vector<1x80x56xf32>
    %70 = vector.shape_cast %69 : vector<1x80x56xf32> to vector<80x56xf32>
    %71 = vector.extract_strided_slice %70 {offsets = [0, 0], sizes = [50, 50], strides = [1, 1]} : vector<80x56xf32> to vector<50x50xf32>
    %c5_41 = arith.constant 5 : index
    %c0_42 = arith.constant 0 : index
    %c0_43 = arith.constant 0 : index
    %72 = vector.load %arg3[%c5_41, %c0_42, %c0_43] : memref<7x80x1xf32, #tpu.memory_space<vmem>>, vector<1x80x1xf32>
    %73 = vector.shape_cast %72 : vector<1x80x1xf32> to vector<80x1xf32>
    %74 = vector.extract_strided_slice %73 {offsets = [0, 0], sizes = [50, 1], strides = [1, 1]} : vector<80x1xf32> to vector<50x1xf32>
    %cst_44 = arith.constant dense<0.000000e+00> : vector<50x256xf32>
    %75 = tpu.matmul %71, %68, %cst_44 {dimension_numbers = #tpu.dot_dimension_numbers<[1], [0], [0], [1], [0, 0, 1, 1], [], []>} : vector<50x50xf32>, vector<50x256xf32>, vector<50x256xf32> -> vector<50x256xf32>
    %76 = vector.broadcast %74 : vector<50x1xf32> to vector<50x256xf32>
    %77 = arith.addf %75, %76 : vector<50x256xf32>
    %cst_45 = arith.constant 0.000000e+00 : f32
    %78 = vector.broadcast %cst_45 : f32 to vector<50x256xf32>
    %79 = arith.cmpf ogt, %77, %78 : vector<50x256xf32>
    %cst_46 = arith.constant 0.000000e+00 : f32
    %80 = vector.broadcast %cst_46 : f32 to vector<50x256xf32>
    %81 = arith.select %79, %80, %77 : vector<50x256xi1>, vector<50x256xf32>
    %cst_47 = arith.constant 0.000000e+00 : f32
    %82 = vector.broadcast %cst_47 : f32 to vector<50x256xf32>
    %83 = arith.cmpf ogt, %77, %82 : vector<50x256xf32>
    %84 = math.exp %81 : vector<50x256xf32>
    %cst_48 = arith.constant 1.000000e+00 : f32
    %85 = vector.broadcast %cst_48 : f32 to vector<50x256xf32>
    %86 = arith.subf %84, %85 : vector<50x256xf32>
    %87 = arith.select %83, %77, %86 : vector<50x256xi1>, vector<50x256xf32>
    %c6 = arith.constant 6 : index
    %c0_49 = arith.constant 0 : index
    %c0_50 = arith.constant 0 : index
    %88 = vector.load %arg2[%c6, %c0_49, %c0_50] : memref<7x80x56xf32, #tpu.memory_space<vmem>>, vector<1x80x56xf32>
    %89 = vector.shape_cast %88 : vector<1x80x56xf32> to vector<80x56xf32>
    %90 = vector.extract_strided_slice %89 {offsets = [0, 0], sizes = [80, 50], strides = [1, 1]} : vector<80x56xf32> to vector<80x50xf32>
    %c6_51 = arith.constant 6 : index
    %c0_52 = arith.constant 0 : index
    %c0_53 = arith.constant 0 : index
    %91 = vector.load %arg3[%c6_51, %c0_52, %c0_53] : memref<7x80x1xf32, #tpu.memory_space<vmem>>, vector<1x80x1xf32>
    %92 = vector.shape_cast %91 : vector<1x80x1xf32> to vector<80x1xf32>
    %cst_54 = arith.constant dense<0.000000e+00> : vector<80x256xf32>
    %93 = tpu.matmul %90, %87, %cst_54 {dimension_numbers = #tpu.dot_dimension_numbers<[1], [0], [0], [1], [0, 0, 1, 1], [], []>} : vector<80x50xf32>, vector<50x256xf32>, vector<80x256xf32> -> vector<80x256xf32>
    %94 = vector.broadcast %92 : vector<80x1xf32> to vector<80x256xf32>
    %95 = arith.addf %93, %94 : vector<80x256xf32>
    %c0_55 = arith.constant 0 : index
    %c0_56 = arith.constant 0 : index
    %96 = vector.load %arg4[%c0_55, %c0_56] : memref<80x256xf32, #tpu.memory_space<vmem>>, vector<80x256xf32>
    tpu.vector_store %arg4[%c0_55, %c0_56], %95 {strides = array<i32>} : memref<80x256xf32, #tpu.memory_space<vmem>>, vector<80x256xf32>,
    return
  }
  func.func @transform_0(%arg0: i32) -> (i32, i32) {
    %c0_i32 = arith.constant 0 : i32
    %c0_i32_0 = arith.constant 0 : i32
    return %c0_i32, %arg0 : i32, i32
  }
  func.func @transform_1(%arg0: i32) -> (i32, i32, i32) {
    %c0_i32 = arith.constant 0 : i32
    %c0_i32_0 = arith.constant 0 : i32
    %c0_i32_1 = arith.constant 0 : i32
    %c0_i32_2 = arith.constant 0 : i32
    return %c0_i32, %c0_i32_0, %c0_i32_1 : i32, i32, i32
  }
  func.func @transform_2(%arg0: i32) -> (i32, i32, i32) {
    %c0_i32 = arith.constant 0 : i32
    %c0_i32_0 = arith.constant 0 : i32
    %c0_i32_1 = arith.constant 0 : i32
    %c0_i32_2 = arith.constant 0 : i32
    return %c0_i32, %c0_i32_0, %c0_i32_1 : i32, i32, i32
  }
  func.func @transform_3(%arg0: i32) -> (i32, i32) {
    %c0_i32 = arith.constant 0 : i32
    %c0_i32_0 = arith.constant 0 : i32
    return %c0_i32, %arg0 : i32, i32
  }
}

</mosaic_0001>

<llo_original>
// kernel: condensation_net_2_by_2.1
$region0: #{condensation_net_2_by_2.1}
  #allocation0 [shape = 'u32[]', space=smem, size = 0x4, offset = 0x4, fixed_abs, tag = 'smem constant byte address 0x4 - core index']
  #allocation1 [shape = 'u32[144,128]{1,0:T(1,128)}', space=vmem, size = 0x12000, scoped, tag = 'internal scratch']
  %s0 = inlined_call_operand.vmem [shape: f32[4,512], index: 0, kind: input, shape index: {}]
  %s1 = inlined_call_operand.vmem [shape: f32[7,80,56], index: 1, kind: input, shape index: {}]
  %s2 = inlined_call_operand.vmem [shape: f32[7,80,1], index: 2, kind: input, shape index: {}]
  %s3 = inlined_call_operand.hbm [shape: f32[80,512], index: 3, kind: output, shape index: {}]
  %s4 = sld [smem:[#allocation0]]
  $region45: #{condensation_net_2_by_2.1} parent=0
    _
  %s6 = ssub.s32 1, %s4
  %s7 = scalar_select 0, %s6, %s4
  $region1: #{condensation_net_2_by_2.1} parent=0
    #allocation2 [shape = 'u8[163840]{0}', space=vmem, size = 0x28000, scoped, tag = 'output window, operand 0']
    #allocation3 [shape = 's32[2]{0}', space=sflag, size = 0x8, scoped, tag = 'scoped memory for condensation_net_2_by_2.1']
    %8 = vsyncpa [#allocation3], 0
    %s9 = scalar_lea.sflag [#allocation3], 1
    %10 = vsyncpa %s9, 0
    loop: start=0, step=1, limit=4
    $region2: #{condensation_net_2_by_2.1} parent=1 // loop_pre_header
      _
    $region3: #{condensation_net_2_by_2.1} parent=1 // loop_header
      %s12 = sphi 0, %s16
      %p13 = scmp.ge.s32.totalorder %s12, 4
      %s22 = sphi 0, %s24
      %s25 = sphi 0, %s22
      %s26 = sphi 0, %s25
      %s42 = sphi 0, %s26
      %s46 = sphi 0, %s46
      %s48 = sphi 0, %s46
      %s49 = sphi 0, %s48
      %s63 = sphi 0, %s49
      %s67 = sphi 0, %s67
      %s69 = sphi 0, %s67
      %s70 = sphi 0, %s69
      %s84 = sphi 0, %s70
      %s90 = sphi 0, %s92
      %s93 = sphi 0, %s90
      %s94 = sphi 0, %s93
      %s110 = sphi 0, %s94
    $region4: #{condensation_net_2_by_2.1} parent=1 // loop_header_branch
      %15 = sbr.rel (%p13) target = $region8
    $region5: #{condensation_net_2_by_2.1} parent=1 // loop_body
      %s17 = ssub.s32 %s12, 1
      %s18 = ssub.s32 %s12, 2
      %s19 = sadd.s32 %s12, 1
      %s20 = ssub.s32 %s12, %s19
      %p21 = scmp.eq.s32.totalorder %s20, 0
      %s23 = sadd.s32 %s22, 1
      %s24 = scalar_select %p21, %s22, %s23
      %p27 = pneg %p21
      %p28 = scmp.eq.s32.totalorder %s12, 1
      %p29 = por %p27, %p28
      %p30 = scmp.ne.s32.totalorder %s22, %s25
      %p31 = scmp.eq.s32.totalorder %s12, 0
      %p32 = por %p30, %p31
      %p33 = scmp.ne.s32.totalorder %s22, %s25
      %p34 = scmp.eq.s32.totalorder %s17, 1
      %p35 = por %p33, %p34
      %p36 = scmp.ne.s32.totalorder %s25, %s26
      %p37 = scmp.eq.s32.totalorder %s17, 0
      %p38 = por %p36, %p37
      %p39 = scmp.ne.s32.totalorder %s25, %s26
      %p40 = scmp.eq.s32.totalorder %s18, 1
      %p41 = por %p39, %p40
      %p43 = scmp.ne.s32.totalorder %s26, %s42
      %p44 = scmp.eq.s32.totalorder %s18, 0
      %p45 = por %p43, %p44
      %s47 = sadd.s32 %s46, 1
      %p50 = scmp.eq.s32.totalorder %s12, 1
      %p51 = scmp.ne.s32.totalorder %s46, %s48
      %p52 = scmp.eq.s32.totalorder %s12, 0
      %p53 = por %p51, %p52
      %p54 = scmp.ne.s32.totalorder %s46, %s48
      %p55 = scmp.eq.s32.totalorder %s17, 1
      %p56 = por %p54, %p55
      %p57 = scmp.ne.s32.totalorder %s48, %s49
      %p58 = scmp.eq.s32.totalorder %s17, 0
      %p59 = por %p57, %p58
      %p60 = scmp.ne.s32.totalorder %s48, %s49
      %p61 = scmp.eq.s32.totalorder %s18, 1
      %p62 = por %p60, %p61
      %p64 = scmp.ne.s32.totalorder %s49, %s63
      %p65 = scmp.eq.s32.totalorder %s18, 0
      %p66 = por %p64, %p65
      %s68 = sadd.s32 %s67, 1
      %p71 = scmp.eq.s32.totalorder %s12, 1
      %p72 = scmp.ne.s32.totalorder %s67, %s69
      %p73 = scmp.eq.s32.totalorder %s12, 0
      %p74 = por %p72, %p73
      %p75 = scmp.ne.s32.totalorder %s67, %s69
      %p76 = scmp.eq.s32.totalorder %s17, 1
      %p77 = por %p75, %p76
      %p78 = scmp.ne.s32.totalorder %s69, %s70
      %p79 = scmp.eq.s32.totalorder %s17, 0
      %p80 = por %p78, %p79
      %p81 = scmp.ne.s32.totalorder %s69, %s70
      %p82 = scmp.eq.s32.totalorder %s18, 1
      %p83 = por %p81, %p82
      %p85 = scmp.ne.s32.totalorder %s70, %s84
      %p86 = scmp.eq.s32.totalorder %s18, 0
      %p87 = por %p85, %p86
      %s88 = ssub.s32 %s12, %s19
      %p89 = scmp.eq.s32.totalorder %s88, 0
      %s91 = sadd.s32 %s90, 1
      %s92 = scalar_select %p89, %s90, %s91
      %p95 = pneg %p89
      %p96 = scmp.eq.s32.totalorder %s12, 1
      %p97 = por %p95, %p96
      %p98 = scmp.ne.s32.totalorder %s90, %s93
      %p99 = scmp.eq.s32.totalorder %s12, 0
      %p100 = por %p98, %p99
      %p101 = scmp.ne.s32.totalorder %s90, %s93
      %p102 = scmp.eq.s32.totalorder %s17, 1
      %p103 = por %p101, %p102
      %p104 = scmp.ne.s32.totalorder %s93, %s94
      %p105 = scmp.eq.s32.totalorder %s17, 0
      %p106 = por %p104, %p105
      %p107 = scmp.ne.s32.totalorder %s93, %s94
      %p108 = scmp.eq.s32.totalorder %s18, 1
      %p109 = por %p107, %p108
      %p111 = scmp.ne.s32.totalorder %s94, %s110
      %p112 = scmp.eq.s32.totalorder %s18, 0
      %p113 = por %p111, %p112
      %p114 = scmp.le.s32.totalorder 1, %s12
      %p115 = scmp.lt.s32.totalorder %s12, 3
      %p116 = pnand %p114, %p115
      %p117 = pneg %p116
      // Predicated region
      $region9: #{condensation_net_2_by_2.1} parent=5 // pred_check
        _
      $region10: #{condensation_net_2_by_2.1} parent=5 // pred_check_branch
        %119 = sbr.rel (%p116) target = $region12
      $region11: #{condensation_net_2_by_2.1} parent=5 // pred_region
        %s120 = ssub.s32 %s12, 1
        // Predicated region
        $region13: #{condensation_net_2_by_2.1} parent=11 // pred_check
          %p121 = pneg %p59
        $region14: #{condensation_net_2_by_2.1} parent=11 // pred_check_branch
          %123 = sbr.rel (%p121) target = $region16
        $region15: #{condensation_net_2_by_2.1} parent=11 // pred_region
          _
        $region16: #{condensation_net_2_by_2.1} parent=11 // pred_fallthru
          _
        // Predicated region
        $region17: #{condensation_net_2_by_2.1} parent=11 // pred_check
          %p124 = pneg %p80
        $region18: #{condensation_net_2_by_2.1} parent=11 // pred_check_branch
          %126 = sbr.rel (%p124) target = $region20
        $region19: #{condensation_net_2_by_2.1} parent=11 // pred_region
          _
        $region20: #{condensation_net_2_by_2.1} parent=11 // pred_fallthru
          _
      $region12: #{condensation_net_2_by_2.1} parent=5 // pred_fallthru
        _
      %p127 = scmp.lt.s32.totalorder %s12, 2
      // Predicated region
      $region21: #{condensation_net_2_by_2.1} parent=5 // pred_check
        %p128 = pneg %p127
      $region22: #{condensation_net_2_by_2.1} parent=5 // pred_check_branch
        %130 = sbr.rel (%p128) target = $region24
      $region23: #{condensation_net_2_by_2.1} parent=5 // pred_region
        // Predicated region
        $region25: #{condensation_net_2_by_2.1} parent=23 // pred_check
          %p131 = pneg %p32
        $region26: #{condensation_net_2_by_2.1} parent=23 // pred_check_branch
          %133 = sbr.rel (%p131) target = $region28
        $region27: #{condensation_net_2_by_2.1} parent=23 // pred_region
          %s134 = smul.u32 2, %s12
          %p135 = scmp.lt.s32.totalorder %s134, 3
          %s136 = scalar_select %p135, %s134, 3
          %s137 = smul.addr %s136, 4
          %s138 = scalar_lea.vmem %s0, %s137
          %s139 = smul.u32 2, %s12
        $region28: #{condensation_net_2_by_2.1} parent=23 // pred_fallthru
          _
      $region24: #{condensation_net_2_by_2.1} parent=5 // pred_fallthru
        _
      %p140 = scmp.le.s32.totalorder 1, %s12
      %p141 = scmp.lt.s32.totalorder %s12, 3
      %p142 = pnand %p140, %p141
      %p143 = pneg %p142
      // Predicated region
      $region29: #{condensation_net_2_by_2.1} parent=5 // pred_check
        _
      $region30: #{condensation_net_2_by_2.1} parent=5 // pred_check_branch
        %145 = sbr.rel (%p142) target = $region32
      $region31: #{condensation_net_2_by_2.1} parent=5 // pred_region
        %s146 = ssub.s32 %s12, 1
        %s147 = smul.u32 2, %s17
        %p148 = scmp.lt.s32.totalorder %s147, 3
        %s149 = scalar_select %p148, %s147, 3
        %s150 = smul.addr %s149, 4
        %s151 = scalar_lea.vmem %s0, %s150
        %p152 = pneg %p38
        %p153 = pneg %p35
        %p154 = pneg %p59
        %p155 = pneg %p56
        %p156 = pneg %p80
        %p157 = pneg %p77
        %p158 = pneg %p106
        %p159 = pneg %p103
        %s160 = sand.u32 %s93, 1
        %s161 = scalar_lea.sflag [#allocation3], %s160
        %s162 = sand.u32 %s93, 1
        %s163 = smul.addr %s162, 160
        %s164 = scalar_lea.vmem [#allocation2], %s163
        %s165 = smul.u32 2, %s17
        %p166 = scmp.lt.s32.totalorder %s165, 3
        %s167 = scalar_select %p166, %s165, 3
        %s168 = smul.addr %s167, 4
        %s169 = scalar_lea.vmem %s0, %s168
        %s170 = smul.u32 2, %s17
        %s171 = smul.u32 2, %s17
        %v172 = vld [vmem:[%s169] sm:$0xff]
        %v173 = vld [vmem:[%s1] sm:$0xff]
        %v174 = vld [vmem:[%s1 + $0x8] sm:$0xff]
        %v175 = vld [vmem:[%s1 + $0x10] sm:$0xff]
        %v176 = vld [vmem:[%s1 + $0x18] sm:$0xff]
        %v177 = vld [vmem:[%s1 + $0x20] sm:$0xff]
        %v178 = vld [vmem:[%s1 + $0x28] sm:$0xff]
        %v179 = vld [vmem:[%s1 + $0x30] sm:$0xff]
        %v180 = vld [vmem:[%s2] sm:$0xff]
        %v181 = vld [vmem:[%s2 + $0x8] sm:$0xff]
        %v182 = vld [vmem:[%s2 + $0x10] sm:$0xff]
        %v183 = vld [vmem:[%s2 + $0x18] sm:$0xff]
        %v184 = vld [vmem:[%s2 + $0x20] sm:$0xff]
        %v185 = vld [vmem:[%s2 + $0x28] sm:$0xff]
        %v186 = vld [vmem:[%s2 + $0x30] sm:$0xff]
        %188 = vset.pattern.permute.xlu0 0
        %189 = vperm.xlu0 %188, %v180
        %v190 = vpop.permute.xlu0 %189
        %193 = vset.pattern.permute.xlu0 0
        %194 = vperm.xlu0 %193, %v181
        %v195 = vpop.permute.xlu0 %194
        %198 = vset.pattern.permute.xlu0 0
        %199 = vperm.xlu0 %198, %v182
        %v200 = vpop.permute.xlu0 %199
        %203 = vset.pattern.permute.xlu0 0
        %204 = vperm.xlu0 %203, %v183
        %v205 = vpop.permute.xlu0 %204
        %208 = vset.pattern.permute.xlu0 0
        %209 = vperm.xlu0 %208, %v184
        %v210 = vpop.permute.xlu0 %209
        %213 = vset.pattern.permute.xlu0 0
        %214 = vperm.xlu0 %213, %v185
        %v215 = vpop.permute.xlu0 %214
        %218 = vset.pattern.permute.xlu0 0
        %219 = vperm.xlu0 %218, %v186
        %v220 = vpop.permute.xlu0 %219
        %v223 = vcombine.high %v172, %v172
        %vm224 = vcmask 31744
        %v226 = vsel %vm224, %v173, 0
        %v229 = vsel %vm224, %v174, 0
        %v232 = vsel %vm224, %v175, 0
        %v235 = vsel %vm224, %v176, 0
        %v238 = vsel %vm224, %v177, 0
        %v241 = vsel %vm224, %v178, 0
        %v244 = vsel %vm224, %v179, 0
        %vm246 = vcmask 1043456
        %v247 = vsel %vm246, %v172, 0
        %v249 = vsel %vm246, %v223, 0
        %251 = vmatprep.subr.mxu0 0.0
        %252 = vmatpush1.msra.mxu0 0.0
        %253 = vmatprep.subr.mxu0 0.0
        %254 = vmatpush1.msra.mxu0 0.0
        %255 = vmatprep.subr.mxu0 0.0
        %256 = vmatpush1.msra.mxu0 0.0
        %257 = vmatprep.subr.mxu0 0.0
        %258 = vmatpush1.msra.mxu0 0.0
        %259 = vmatprep.subr.mxu0 0.0
        %260 = vmatpush1.msra.mxu0 0.0
        %261 = vmatprep.subr.mxu0 0.0
        %262 = vmatpush1.msra.mxu0 0.0
        %263 = vmatprep.subr.mxu0 0.0
        %264 = vmatpush1.msra.mxu0 0.0
        %265 = vmatprep.subr.mxu0 0.0
        %266 = vmatpush1.msra.mxu0 0.0
        %267 = vmatprep.subr.mxu0 0.0
        %268 = vmatpush1.msra.mxu0 0.0
        %269 = vmatprep.subr.mxu0 0.0
        %270 = vmatpush1.msra.mxu0 0.0
        %271 = vmatprep.subr.mxu0 0.0
        %272 = vmatpush1.msra.mxu0 0.0
        %273 = vmatprep.subr.mxu0 0.0
        %274 = vmatpush1.msra.mxu0 0.0
        %275 = vmatprep.subr.mxu0 0.0
        %276 = vmatpush1.msra.mxu0 0.0
        %277 = vmatprep.subr.mxu0 0.0
        %278 = vmatpush1.msra.mxu0 0.0
        %279 = vmatprep.subr.mxu0 0.0
        %280 = vmatpush1.msra.mxu0 0.0
        %281 = vmatprep.subr.mxu0 %v249
        %282 = vmatpush1.msra.mxu0 %v247
        %283 = vmatprep.subr.mxu0 0.0
        %284 = vmatpush2.msra.mxu0 0.0
        %285 = vmatprep.subr.mxu0 0.0
        %286 = vmatpush2.msra.mxu0 0.0
        %287 = vmatprep.subr.mxu0 0.0
        %288 = vmatpush2.msra.mxu0 0.0
        %289 = vmatprep.subr.mxu0 0.0
        %290 = vmatpush2.msra.mxu0 0.0
        %291 = vmatprep.subr.mxu0 0.0
        %292 = vmatpush2.msra.mxu0 0.0
        %293 = vmatprep.subr.mxu0 0.0
        %294 = vmatpush2.msra.mxu0 0.0
        %295 = vmatprep.subr.mxu0 0.0
        %296 = vmatpush2.msra.mxu0 0.0
        %297 = vmatprep.subr.mxu0 0.0
        %298 = vmatpush2.msra.mxu0 0.0
        %299 = vmatprep.subr.mxu0 0.0
        %300 = vmatpush2.msra.mxu0 0.0
        %301 = vmatprep.subr.mxu0 0.0
        %302 = vmatpush2.msra.mxu0 0.0
        %303 = vmatprep.subr.mxu0 0.0
        %304 = vmatpush2.msra.mxu0 0.0
        %305 = vmatprep.subr.mxu0 0.0
        %306 = vmatpush2.msra.mxu0 0.0
        %307 = vmatprep.subr.mxu0 0.0
        %308 = vmatpush2.msra.mxu0 0.0
        %309 = vmatprep.subr.mxu0 0.0
        %310 = vmatpush2.msra.mxu0 0.0
        %311 = vmatprep.subr.mxu0 0.0
        %312 = vmatpush2.msra.mxu0 0.0
        %313 = vmatprep.subr.mxu0 0.0
        %314 = vmatpush2.msra.mxu0 0.0
        %315 = vmatprep.mubr.f32.mxu0 0.0
        %316 = vmatmul.mubr.f32.gmra.mxu0 %v226
        %v317 = vpop.f32.mrf.mxu0
        %v318 = vadd.f32 %v190, %v317
        %v319 = vpop.f32.mrf.mxu0
        %v320 = vadd.f32 %v190, %v319
        %321 = vmatprep.mubr.f32.mxu0 0.0
        %322 = vmatmul.mubr.f32.gmra.mxu0 %v229
        %v323 = vpop.f32.mrf.mxu0
        %v324 = vadd.f32 %v195, %v323
        %v325 = vpop.f32.mrf.mxu0
        %v326 = vadd.f32 %v195, %v325
        %327 = vmatprep.mubr.f32.mxu0 0.0
        %328 = vmatmul.mubr.f32.gmra.mxu0 %v232
        %v329 = vpop.f32.mrf.mxu0
        %v330 = vadd.f32 %v200, %v329
        %v331 = vpop.f32.mrf.mxu0
        %v332 = vadd.f32 %v200, %v331
        %333 = vmatprep.mubr.f32.mxu0 0.0
        %334 = vmatmul.mubr.f32.gmra.mxu0 %v235
        %v335 = vpop.f32.mrf.mxu0
        %v336 = vadd.f32 %v205, %v335
        %v337 = vpop.f32.mrf.mxu0
        %v338 = vadd.f32 %v205, %v337
        %339 = vmatprep.mubr.f32.mxu0 0.0
        %340 = vmatmul.mubr.f32.gmra.mxu0 %v238
        %v341 = vpop.f32.mrf.mxu0
        %v342 = vadd.f32 %v210, %v341
        %v343 = vpop.f32.mrf.mxu0
        %v344 = vadd.f32 %v210, %v343
        %345 = vmatprep.mubr.f32.mxu0 0.0
        %346 = vmatmul.mubr.f32.gmra.mxu0 %v241
        %v347 = vpop.f32.mrf.mxu0
        %v348 = vadd.f32 %v215, %v347
        %v349 = vpop.f32.mrf.mxu0
        %v350 = vadd.f32 %v215, %v349
        %351 = vmatprep.mubr.f32.mxu0 0.0
        %352 = vmatmul.mubr.f32.gmra.mxu0 %v244
        %v353 = vpop.f32.mrf.mxu0
        %v354 = vadd.f32 %v220, %v353
        %v355 = vpop.f32.mrf.mxu0
        %v356 = vadd.f32 %v220, %v355
        %357 = vdwg.mxu0
        %v358 = vtanh.pop %v318
        %v359 = vtanh.pop %v320
        %v360 = vtanh.pop %v324
        %v361 = vtanh.pop %v326
        %v362 = vtanh.pop %v330
        %v363 = vtanh.pop %v332
        %v364 = vtanh.pop %v336
        %v365 = vtanh.pop %v338
        %v366 = vtanh.pop %v342
        %v367 = vtanh.pop %v344
        %v368 = vtanh.pop %v348
        %v369 = vtanh.pop %v350
        %v370 = vtanh.pop %v354
        %v371 = vtanh.pop %v356
        %s372 = scalar_lea.vmem %s1, 80
        %v373 = vld [vmem:[%s372] sm:$0xff]
        %v374 = vld [vmem:[%s372 + $0x8] sm:$0xff]
        %v375 = vld [vmem:[%s372 + $0x10] sm:$0xff]
        %v376 = vld [vmem:[%s372 + $0x18] sm:$0xff]
        %v377 = vld [vmem:[%s372 + $0x20] sm:$0xff]
        %v378 = vld [vmem:[%s372 + $0x28] sm:$0xff]
        %v379 = vld [vmem:[%s372 + $0x30] sm:$0xff]
        %s380 = scalar_lea.vmem %s2, 80
        %v381 = vld [vmem:[%s380] sm:$0xff]
        %v382 = vld [vmem:[%s380 + $0x8] sm:$0xff]
        %v383 = vld [vmem:[%s380 + $0x10] sm:$0xff]
        %v384 = vld [vmem:[%s380 + $0x18] sm:$0xff]
        %v385 = vld [vmem:[%s380 + $0x20] sm:$0xff]
        %v386 = vld [vmem:[%s380 + $0x28] sm:$0xff]
        %v387 = vld [vmem:[%s380 + $0x30] sm:$0xff]
        %389 = vset.pattern.permute.xlu0 0
        %390 = vperm.xlu0 %389, %v381
        %v391 = vpop.permute.xlu0 %390
        %394 = vset.pattern.permute.xlu0 0
        %395 = vperm.xlu0 %394, %v382
        %v396 = vpop.permute.xlu0 %395
        %399 = vset.pattern.permute.xlu0 0
        %400 = vperm.xlu0 %399, %v383
        %v401 = vpop.permute.xlu0 %400
        %404 = vset.pattern.permute.xlu0 0
        %405 = vperm.xlu0 %404, %v384
        %v406 = vpop.permute.xlu0 %405
        %409 = vset.pattern.permute.xlu0 0
        %410 = vperm.xlu0 %409, %v385
        %v411 = vpop.permute.xlu0 %410
        %414 = vset.pattern.permute.xlu0 0
        %415 = vperm.xlu0 %414, %v386
        %v416 = vpop.permute.xlu0 %415
        %419 = vset.pattern.permute.xlu0 0
        %420 = vperm.xlu0 %419, %v387
        %v421 = vpop.permute.xlu0 %420
        %vm423 = vcmask 408576
        %v425 = vsel %vm423, %v373, 0
        %v428 = vsel %vm423, %v374, 0
        %v431 = vsel %vm423, %v375, 0
        %v434 = vsel %vm423, %v376, 0
        %v437 = vsel %vm423, %v377, 0
        %v440 = vsel %vm423, %v378, 0
        %v443 = vsel %vm423, %v379, 0
        %vm445 = vcmask 1041408
        %v447 = vsel %vm445, %v370, 0
        %v450 = vsel %vm445, %v371, 0
        %452 = vmatprep.subr.mxu0 0.0
        %453 = vmatpush1.msra.mxu0 0.0
        %454 = vmatprep.subr.mxu0 0.0
        %455 = vmatpush1.msra.mxu0 0.0
        %456 = vmatprep.subr.mxu0 0.0
        %457 = vmatpush1.msra.mxu0 0.0
        %458 = vmatprep.subr.mxu0 0.0
        %459 = vmatpush1.msra.mxu0 0.0
        %460 = vmatprep.subr.mxu0 0.0
        %461 = vmatpush1.msra.mxu0 0.0
        %462 = vmatprep.subr.mxu0 0.0
        %463 = vmatpush1.msra.mxu0 0.0
        %464 = vmatprep.subr.mxu0 0.0
        %465 = vmatpush1.msra.mxu0 0.0
        %466 = vmatprep.subr.mxu0 0.0
        %467 = vmatpush1.msra.mxu0 0.0
        %468 = vmatprep.subr.mxu0 0.0
        %469 = vmatpush1.msra.mxu0 0.0
        %470 = vmatprep.subr.mxu0 %v450
        %471 = vmatpush1.msra.mxu0 %v447
        %472 = vmatprep.subr.mxu0 %v369
        %473 = vmatpush1.msra.mxu0 %v368
        %474 = vmatprep.subr.mxu0 %v367
        %475 = vmatpush1.msra.mxu0 %v366
        %476 = vmatprep.subr.mxu0 %v365
        %477 = vmatpush1.msra.mxu0 %v364
        %478 = vmatprep.subr.mxu0 %v363
        %479 = vmatpush1.msra.mxu0 %v362
        %480 = vmatprep.subr.mxu0 %v361
        %481 = vmatpush1.msra.mxu0 %v360
        %482 = vmatprep.subr.mxu0 %v359
        %483 = vmatpush1.msra.mxu0 %v358
        %484 = vmatprep.subr.mxu0 0.0
        %485 = vmatpush2.msra.mxu0 0.0
        %486 = vmatprep.subr.mxu0 0.0
        %487 = vmatpush2.msra.mxu0 0.0
        %488 = vmatprep.subr.mxu0 0.0
        %489 = vmatpush2.msra.mxu0 0.0
        %490 = vmatprep.subr.mxu0 0.0
        %491 = vmatpush2.msra.mxu0 0.0
        %492 = vmatprep.subr.mxu0 0.0
        %493 = vmatpush2.msra.mxu0 0.0
        %494 = vmatprep.subr.mxu0 0.0
        %495 = vmatpush2.msra.mxu0 0.0
        %496 = vmatprep.subr.mxu0 0.0
        %497 = vmatpush2.msra.mxu0 0.0
        %498 = vmatprep.subr.mxu0 0.0
        %499 = vmatpush2.msra.mxu0 0.0
        %500 = vmatprep.subr.mxu0 0.0
        %501 = vmatpush2.msra.mxu0 0.0
        %502 = vmatprep.subr.mxu0 0.0
        %503 = vmatpush2.msra.mxu0 0.0
        %504 = vmatprep.subr.mxu0 0.0
        %505 = vmatpush2.msra.mxu0 0.0
        %506 = vmatprep.subr.mxu0 0.0
        %507 = vmatpush2.msra.mxu0 0.0
        %508 = vmatprep.subr.mxu0 0.0
        %509 = vmatpush2.msra.mxu0 0.0
        %510 = vmatprep.subr.mxu0 0.0
        %511 = vmatpush2.msra.mxu0 0.0
        %512 = vmatprep.subr.mxu0 0.0
        %513 = vmatpush2.msra.mxu0 0.0
        %514 = vmatprep.subr.mxu0 0.0
        %515 = vmatpush2.msra.mxu0 0.0
        %516 = vmatprep.mubr.f32.mxu0 0.0
        %517 = vmatmul.mubr.f32.gmra.mxu0 %v425
        %v518 = vpop.f32.mrf.mxu0
        %v519 = vadd.f32 %v391, %v518
        %v520 = vpop.f32.mrf.mxu0
        %v521 = vadd.f32 %v391, %v520
        %522 = vmatprep.mubr.f32.mxu0 0.0
        %523 = vmatmul.mubr.f32.gmra.mxu0 %v428
        %v524 = vpop.f32.mrf.mxu0
        %v525 = vadd.f32 %v396, %v524
        %v526 = vpop.f32.mrf.mxu0
        %v527 = vadd.f32 %v396, %v526
        %528 = vmatprep.mubr.f32.mxu0 0.0
        %529 = vmatmul.mubr.f32.gmra.mxu0 %v431
        %v530 = vpop.f32.mrf.mxu0
        %v531 = vadd.f32 %v401, %v530
        %v532 = vpop.f32.mrf.mxu0
        %v533 = vadd.f32 %v401, %v532
        %534 = vmatprep.mubr.f32.mxu0 0.0
        %535 = vmatmul.mubr.f32.gmra.mxu0 %v434
        %v536 = vpop.f32.mrf.mxu0
        %v537 = vadd.f32 %v406, %v536
        %v538 = vpop.f32.mrf.mxu0
        %v539 = vadd.f32 %v406, %v538
        %540 = vmatprep.mubr.f32.mxu0 0.0
        %541 = vmatmul.mubr.f32.gmra.mxu0 %v437
        %v542 = vpop.f32.mrf.mxu0
        %v543 = vadd.f32 %v411, %v542
        %v544 = vpop.f32.mrf.mxu0
        %v545 = vadd.f32 %v411, %v544
        %546 = vmatprep.mubr.f32.mxu0 0.0
        %547 = vmatmul.mubr.f32.gmra.mxu0 %v440
        %v548 = vpop.f32.mrf.mxu0
        %v549 = vadd.f32 %v416, %v548
        %v550 = vpop.f32.mrf.mxu0
        %v551 = vadd.f32 %v416, %v550
        %552 = vmatprep.mubr.f32.mxu0 0.0
        %553 = vmatmul.mubr.f32.gmra.mxu0 %v443
        %v554 = vpop.f32.mrf.mxu0
        %v555 = vadd.f32 %v421, %v554
        %v556 = vpop.f32.mrf.mxu0
        %v557 = vadd.f32 %v421, %v556
        %558 = vdwg.mxu0
        %vm559 = vcmp.gt.f32.partialorder %v519, 0.0
        %vm560 = vcmp.gt.f32.partialorder %v521, 0.0
        %vm561 = vcmp.gt.f32.partialorder %v525, 0.0
        %vm562 = vcmp.gt.f32.partialorder %v527, 0.0
        %vm563 = vcmp.gt.f32.partialorder %v531, 0.0
        %vm564 = vcmp.gt.f32.partialorder %v533, 0.0
        %vm565 = vcmp.gt.f32.partialorder %v537, 0.0
        %vm566 = vcmp.gt.f32.partialorder %v539, 0.0
        %vm567 = vcmp.gt.f32.partialorder %v543, 0.0
        %vm568 = vcmp.gt.f32.partialorder %v545, 0.0
        %vm569 = vcmp.gt.f32.partialorder %v549, 0.0
        %vm570 = vcmp.gt.f32.partialorder %v551, 0.0
        %vm571 = vcmp.gt.f32.partialorder %v555, 0.0
        %vm572 = vcmp.gt.f32.partialorder %v557, 0.0
        %v573 = vsel %vm559, 0.0, %v519
        %v574 = vsel %vm560, 0.0, %v521
        %v575 = vsel %vm561, 0.0, %v525
        %v576 = vsel %vm562, 0.0, %v527
        %v577 = vsel %vm563, 0.0, %v531
        %v578 = vsel %vm564, 0.0, %v533
        %v579 = vsel %vm565, 0.0, %v537
        %v580 = vsel %vm566, 0.0, %v539
        %v581 = vsel %vm567, 0.0, %v543
        %v582 = vsel %vm568, 0.0, %v545
        %v583 = vsel %vm569, 0.0, %v549
        %v584 = vsel %vm570, 0.0, %v551
        %v585 = vsel %vm571, 0.0, %v555
        %v586 = vsel %vm572, 0.0, %v557
        %v587 = vmul.f32 %v573, 1.442695
        %v588 = vpow.pop %v587
        %v589 = vmul.f32 %v574, 1.442695
        %v590 = vpow.pop %v589
        %v591 = vmul.f32 %v575, 1.442695
        %v592 = vpow.pop %v591
        %v593 = vmul.f32 %v576, 1.442695
        %v594 = vpow.pop %v593
        %v595 = vmul.f32 %v577, 1.442695
        %v596 = vpow.pop %v595
        %v597 = vmul.f32 %v578, 1.442695
        %v598 = vpow.pop %v597
        %v599 = vmul.f32 %v579, 1.442695
        %v600 = vpow.pop %v599
        %v601 = vmul.f32 %v580, 1.442695
        %v602 = vpow.pop %v601
        %v603 = vmul.f32 %v581, 1.442695
        %v604 = vpow.pop %v603
        %v605 = vmul.f32 %v582, 1.442695
        %v606 = vpow.pop %v605
        %v607 = vmul.f32 %v583, 1.442695
        %v608 = vpow.pop %v607
        %v609 = vmul.f32 %v584, 1.442695
        %v610 = vpow.pop %v609
        %v611 = vmul.f32 %v585, 1.442695
        %v612 = vpow.pop %v611
        %v613 = vmul.f32 %v586, 1.442695
        %v614 = vpow.pop %v613
        %v615 = vsub.f32 %v588, 1.0
        %v616 = vsub.f32 %v590, 1.0
        %v617 = vsub.f32 %v592, 1.0
        %v618 = vsub.f32 %v594, 1.0
        %v619 = vsub.f32 %v596, 1.0
        %v620 = vsub.f32 %v598, 1.0
        %v621 = vsub.f32 %v600, 1.0
        %v622 = vsub.f32 %v602, 1.0
        %v623 = vsub.f32 %v604, 1.0
        %v624 = vsub.f32 %v606, 1.0
        %v625 = vsub.f32 %v608, 1.0
        %v626 = vsub.f32 %v610, 1.0
        %v627 = vsub.f32 %v612, 1.0
        %v628 = vsub.f32 %v614, 1.0
        %v629 = vsel %vm559, %v519, %v615
        %v630 = vsel %vm560, %v521, %v616
        %v631 = vsel %vm561, %v525, %v617
        %v632 = vsel %vm562, %v527, %v618
        %v633 = vsel %vm563, %v531, %v619
        %v634 = vsel %vm564, %v533, %v620
        %v635 = vsel %vm565, %v537, %v621
        %v636 = vsel %vm566, %v539, %v622
        %v637 = vsel %vm567, %v543, %v623
        %v638 = vsel %vm568, %v545, %v624
        %v639 = vsel %vm569, %v549, %v625
        %v640 = vsel %vm570, %v551, %v626
        %v641 = vsel %vm571, %v555, %v627
        %v642 = vsel %vm572, %v557, %v628
        %s643 = scalar_lea.vmem %s1, 160
        %v644 = vld [vmem:[%s643] sm:$0xff]
        %v645 = vld [vmem:[%s643 + $0x8] sm:$0xff]
        %v646 = vld [vmem:[%s643 + $0x10] sm:$0xff]
        %v647 = vld [vmem:[%s643 + $0x18] sm:$0xff]
        %v648 = vld [vmem:[%s643 + $0x20] sm:$0xff]
        %v649 = vld [vmem:[%s643 + $0x28] sm:$0xff]
        %v650 = vld [vmem:[%s643 + $0x30] sm:$0xff]
        %s651 = scalar_lea.vmem %s2, 160
        %v652 = vld [vmem:[%s651] sm:$0xff]
        %v653 = vld [vmem:[%s651 + $0x8] sm:$0xff]
        %v654 = vld [vmem:[%s651 + $0x10] sm:$0xff]
        %v655 = vld [vmem:[%s651 + $0x18] sm:$0xff]
        %v656 = vld [vmem:[%s651 + $0x20] sm:$0xff]
        %v657 = vld [vmem:[%s651 + $0x28] sm:$0xff]
        %v658 = vld [vmem:[%s651 + $0x30] sm:$0xff]
        %660 = vset.pattern.permute.xlu0 0
        %661 = vperm.xlu0 %660, %v652
        %v662 = vpop.permute.xlu0 %661
        %665 = vset.pattern.permute.xlu0 0
        %666 = vperm.xlu0 %665, %v653
        %v667 = vpop.permute.xlu0 %666
        %670 = vset.pattern.permute.xlu0 0
        %671 = vperm.xlu0 %670, %v654
        %v672 = vpop.permute.xlu0 %671
        %675 = vset.pattern.permute.xlu0 0
        %676 = vperm.xlu0 %675, %v655
        %v677 = vpop.permute.xlu0 %676
        %680 = vset.pattern.permute.xlu0 0
        %681 = vperm.xlu0 %680, %v656
        %v682 = vpop.permute.xlu0 %681
        %685 = vset.pattern.permute.xlu0 0
        %686 = vperm.xlu0 %685, %v657
        %v687 = vpop.permute.xlu0 %686
        %690 = vset.pattern.permute.xlu0 0
        %691 = vperm.xlu0 %690, %v658
        %v692 = vpop.permute.xlu0 %691
        %v695 = vsel %vm423, %v644, 0
        %v698 = vsel %vm423, %v645, 0
        %v701 = vsel %vm423, %v646, 0
        %v704 = vsel %vm423, %v647, 0
        %v707 = vsel %vm423, %v648, 0
        %v710 = vsel %vm423, %v649, 0
        %v713 = vsel %vm423, %v650, 0
        %v716 = vsel %vm445, %v641, 0
        %v719 = vsel %vm445, %v642, 0
        %721 = vmatprep.subr.mxu0 0.0
        %722 = vmatpush1.msra.mxu0 0.0
        %723 = vmatprep.subr.mxu0 0.0
        %724 = vmatpush1.msra.mxu0 0.0
        %725 = vmatprep.subr.mxu0 0.0
        %726 = vmatpush1.msra.mxu0 0.0
        %727 = vmatprep.subr.mxu0 0.0
        %728 = vmatpush1.msra.mxu0 0.0
        %729 = vmatprep.subr.mxu0 0.0
        %730 = vmatpush1.msra.mxu0 0.0
        %731 = vmatprep.subr.mxu0 0.0
        %732 = vmatpush1.msra.mxu0 0.0
        %733 = vmatprep.subr.mxu0 0.0
        %734 = vmatpush1.msra.mxu0 0.0
        %735 = vmatprep.subr.mxu0 0.0
        %736 = vmatpush1.msra.mxu0 0.0
        %737 = vmatprep.subr.mxu0 0.0
        %738 = vmatpush1.msra.mxu0 0.0
        %739 = vmatprep.subr.mxu0 %v719
        %740 = vmatpush1.msra.mxu0 %v716
        %741 = vmatprep.subr.mxu0 %v640
        %742 = vmatpush1.msra.mxu0 %v639
        %743 = vmatprep.subr.mxu0 %v638
        %744 = vmatpush1.msra.mxu0 %v637
        %745 = vmatprep.subr.mxu0 %v636
        %746 = vmatpush1.msra.mxu0 %v635
        %747 = vmatprep.subr.mxu0 %v634
        %748 = vmatpush1.msra.mxu0 %v633
        %749 = vmatprep.subr.mxu0 %v632
        %750 = vmatpush1.msra.mxu0 %v631
        %751 = vmatprep.subr.mxu0 %v630
        %752 = vmatpush1.msra.mxu0 %v629
        %753 = vmatprep.subr.mxu0 0.0
        %754 = vmatpush2.msra.mxu0 0.0
        %755 = vmatprep.subr.mxu0 0.0
        %756 = vmatpush2.msra.mxu0 0.0
        %757 = vmatprep.subr.mxu0 0.0
        %758 = vmatpush2.msra.mxu0 0.0
        %759 = vmatprep.subr.mxu0 0.0
        %760 = vmatpush2.msra.mxu0 0.0
        %761 = vmatprep.subr.mxu0 0.0
        %762 = vmatpush2.msra.mxu0 0.0
        %763 = vmatprep.subr.mxu0 0.0
        %764 = vmatpush2.msra.mxu0 0.0
        %765 = vmatprep.subr.mxu0 0.0
        %766 = vmatpush2.msra.mxu0 0.0
        %767 = vmatprep.subr.mxu0 0.0
        %768 = vmatpush2.msra.mxu0 0.0
        %769 = vmatprep.subr.mxu0 0.0
        %770 = vmatpush2.msra.mxu0 0.0
        %771 = vmatprep.subr.mxu0 0.0
        %772 = vmatpush2.msra.mxu0 0.0
        %773 = vmatprep.subr.mxu0 0.0
        %774 = vmatpush2.msra.mxu0 0.0
        %775 = vmatprep.subr.mxu0 0.0
        %776 = vmatpush2.msra.mxu0 0.0
        %777 = vmatprep.subr.mxu0 0.0
        %778 = vmatpush2.msra.mxu0 0.0
        %779 = vmatprep.subr.mxu0 0.0
        %780 = vmatpush2.msra.mxu0 0.0
        %781 = vmatprep.subr.mxu0 0.0
        %782 = vmatpush2.msra.mxu0 0.0
        %783 = vmatprep.subr.mxu0 0.0
        %784 = vmatpush2.msra.mxu0 0.0
        %785 = vmatprep.mubr.f32.mxu0 0.0
        %786 = vmatmul.mubr.f32.gmra.mxu0 %v695
        %v787 = vpop.f32.mrf.mxu0
        %v788 = vadd.f32 %v662, %v787
        %v789 = vpop.f32.mrf.mxu0
        %v790 = vadd.f32 %v662, %v789
        %791 = vmatprep.mubr.f32.mxu0 0.0
        %792 = vmatmul.mubr.f32.gmra.mxu0 %v698
        %v793 = vpop.f32.mrf.mxu0
        %v794 = vadd.f32 %v667, %v793
        %v795 = vpop.f32.mrf.mxu0
        %v796 = vadd.f32 %v667, %v795
        %797 = vmatprep.mubr.f32.mxu0 0.0
        %798 = vmatmul.mubr.f32.gmra.mxu0 %v701
        %v799 = vpop.f32.mrf.mxu0
        %v800 = vadd.f32 %v672, %v799
        %v801 = vpop.f32.mrf.mxu0
        %v802 = vadd.f32 %v672, %v801
        %803 = vmatprep.mubr.f32.mxu0 0.0
        %804 = vmatmul.mubr.f32.gmra.mxu0 %v704
        %v805 = vpop.f32.mrf.mxu0
        %v806 = vadd.f32 %v677, %v805
        %v807 = vpop.f32.mrf.mxu0
        %v808 = vadd.f32 %v677, %v807
        %809 = vmatprep.mubr.f32.mxu0 0.0
        %810 = vmatmul.mubr.f32.gmra.mxu0 %v707
        %v811 = vpop.f32.mrf.mxu0
        %v812 = vadd.f32 %v682, %v811
        %v813 = vpop.f32.mrf.mxu0
        %v814 = vadd.f32 %v682, %v813
        %815 = vmatprep.mubr.f32.mxu0 0.0
        %816 = vmatmul.mubr.f32.gmra.mxu0 %v710
        %v817 = vpop.f32.mrf.mxu0
        %v818 = vadd.f32 %v687, %v817
        %v819 = vpop.f32.mrf.mxu0
        %v820 = vadd.f32 %v687, %v819
        %821 = vmatprep.mubr.f32.mxu0 0.0
        %822 = vmatmul.mubr.f32.gmra.mxu0 %v713
        %v823 = vpop.f32.mrf.mxu0
        %v824 = vadd.f32 %v692, %v823
        %v825 = vpop.f32.mrf.mxu0
        %v826 = vadd.f32 %v692, %v825
        %827 = vdwg.mxu0
        %v828 = vtanh.pop %v788
        %v829 = vtanh.pop %v790
        %v830 = vtanh.pop %v794
        %v831 = vtanh.pop %v796
        %v832 = vtanh.pop %v800
        %v833 = vtanh.pop %v802
        %v834 = vtanh.pop %v806
        %v835 = vtanh.pop %v808
        %v836 = vtanh.pop %v812
        %v837 = vtanh.pop %v814
        %v838 = vtanh.pop %v818
        %v839 = vtanh.pop %v820
        %v840 = vtanh.pop %v824
        %v841 = vtanh.pop %v826
        %s842 = scalar_lea.vmem %s1, 240
        %v843 = vld [vmem:[%s842] sm:$0xff]
        %v844 = vld [vmem:[%s842 + $0x8] sm:$0xff]
        %v845 = vld [vmem:[%s842 + $0x10] sm:$0xff]
        %v846 = vld [vmem:[%s842 + $0x18] sm:$0xff]
        %v847 = vld [vmem:[%s842 + $0x20] sm:$0xff]
        %v848 = vld [vmem:[%s842 + $0x28] sm:$0xff]
        %v849 = vld [vmem:[%s842 + $0x30] sm:$0xff]
        %s850 = scalar_lea.vmem %s2, 240
        %v851 = vld [vmem:[%s850] sm:$0xff]
        %v852 = vld [vmem:[%s850 + $0x8] sm:$0xff]
        %v853 = vld [vmem:[%s850 + $0x10] sm:$0xff]
        %v854 = vld [vmem:[%s850 + $0x18] sm:$0xff]
        %v855 = vld [vmem:[%s850 + $0x20] sm:$0xff]
        %v856 = vld [vmem:[%s850 + $0x28] sm:$0xff]
        %v857 = vld [vmem:[%s850 + $0x30] sm:$0xff]
        %859 = vset.pattern.permute.xlu0 0
        %860 = vperm.xlu0 %859, %v851
        %v861 = vpop.permute.xlu0 %860
        %864 = vset.pattern.permute.xlu0 0
        %865 = vperm.xlu0 %864, %v852
        %v866 = vpop.permute.xlu0 %865
        %869 = vset.pattern.permute.xlu0 0
        %870 = vperm.xlu0 %869, %v853
        %v871 = vpop.permute.xlu0 %870
        %874 = vset.pattern.permute.xlu0 0
        %875 = vperm.xlu0 %874, %v854
        %v876 = vpop.permute.xlu0 %875
        %879 = vset.pattern.permute.xlu0 0
        %880 = vperm.xlu0 %879, %v855
        %v881 = vpop.permute.xlu0 %880
        %884 = vset.pattern.permute.xlu0 0
        %885 = vperm.xlu0 %884, %v856
        %v886 = vpop.permute.xlu0 %885
        %889 = vset.pattern.permute.xlu0 0
        %890 = vperm.xlu0 %889, %v857
        %v891 = vpop.permute.xlu0 %890
        %v894 = vsel %vm423, %v843, 0
        %v897 = vsel %vm423, %v844, 0
        %v900 = vsel %vm423, %v845, 0
        %v903 = vsel %vm423, %v846, 0
        %v906 = vsel %vm423, %v847, 0
        %v909 = vsel %vm423, %v848, 0
        %v912 = vsel %vm423, %v849, 0
        %v915 = vsel %vm445, %v840, 0
        %v918 = vsel %vm445, %v841, 0
        %920 = vmatprep.subr.mxu0 0.0
        %921 = vmatpush1.msra.mxu0 0.0
        %922 = vmatprep.subr.mxu0 0.0
        %923 = vmatpush1.msra.mxu0 0.0
        %924 = vmatprep.subr.mxu0 0.0
        %925 = vmatpush1.msra.mxu0 0.0
        %926 = vmatprep.subr.mxu0 0.0
        %927 = vmatpush1.msra.mxu0 0.0
        %928 = vmatprep.subr.mxu0 0.0
        %929 = vmatpush1.msra.mxu0 0.0
        %930 = vmatprep.subr.mxu0 0.0
        %931 = vmatpush1.msra.mxu0 0.0
        %932 = vmatprep.subr.mxu0 0.0
        %933 = vmatpush1.msra.mxu0 0.0
        %934 = vmatprep.subr.mxu0 0.0
        %935 = vmatpush1.msra.mxu0 0.0
        %936 = vmatprep.subr.mxu0 0.0
        %937 = vmatpush1.msra.mxu0 0.0
        %938 = vmatprep.subr.mxu0 %v918
        %939 = vmatpush1.msra.mxu0 %v915
        %940 = vmatprep.subr.mxu0 %v839
        %941 = vmatpush1.msra.mxu0 %v838
        %942 = vmatprep.subr.mxu0 %v837
        %943 = vmatpush1.msra.mxu0 %v836
        %944 = vmatprep.subr.mxu0 %v835
        %945 = vmatpush1.msra.mxu0 %v834
        %946 = vmatprep.subr.mxu0 %v833
        %947 = vmatpush1.msra.mxu0 %v832
        %948 = vmatprep.subr.mxu0 %v831
        %949 = vmatpush1.msra.mxu0 %v830
        %950 = vmatprep.subr.mxu0 %v829
        %951 = vmatpush1.msra.mxu0 %v828
        %952 = vmatprep.subr.mxu0 0.0
        %953 = vmatpush2.msra.mxu0 0.0
        %954 = vmatprep.subr.mxu0 0.0
        %955 = vmatpush2.msra.mxu0 0.0
        %956 = vmatprep.subr.mxu0 0.0
        %957 = vmatpush2.msra.mxu0 0.0
        %958 = vmatprep.subr.mxu0 0.0
        %959 = vmatpush2.msra.mxu0 0.0
        %960 = vmatprep.subr.mxu0 0.0
        %961 = vmatpush2.msra.mxu0 0.0
        %962 = vmatprep.subr.mxu0 0.0
        %963 = vmatpush2.msra.mxu0 0.0
        %964 = vmatprep.subr.mxu0 0.0
        %965 = vmatpush2.msra.mxu0 0.0
        %966 = vmatprep.subr.mxu0 0.0
        %967 = vmatpush2.msra.mxu0 0.0
        %968 = vmatprep.subr.mxu0 0.0
        %969 = vmatpush2.msra.mxu0 0.0
        %970 = vmatprep.subr.mxu0 0.0
        %971 = vmatpush2.msra.mxu0 0.0
        %972 = vmatprep.subr.mxu0 0.0
        %973 = vmatpush2.msra.mxu0 0.0
        %974 = vmatprep.subr.mxu0 0.0
        %975 = vmatpush2.msra.mxu0 0.0
        %976 = vmatprep.subr.mxu0 0.0
        %977 = vmatpush2.msra.mxu0 0.0
        %978 = vmatprep.subr.mxu0 0.0
        %979 = vmatpush2.msra.mxu0 0.0
        %980 = vmatprep.subr.mxu0 0.0
        %981 = vmatpush2.msra.mxu0 0.0
        %982 = vmatprep.subr.mxu0 0.0
        %983 = vmatpush2.msra.mxu0 0.0
        %984 = vmatprep.mubr.f32.mxu0 0.0
        %985 = vmatmul.mubr.f32.gmra.mxu0 %v894
        %v986 = vpop.f32.mrf.mxu0
        %v987 = vadd.f32 %v861, %v986
        %v988 = vpop.f32.mrf.mxu0
        %v989 = vadd.f32 %v861, %v988
        %990 = vmatprep.mubr.f32.mxu0 0.0
        %991 = vmatmul.mubr.f32.gmra.mxu0 %v897
        %v992 = vpop.f32.mrf.mxu0
        %v993 = vadd.f32 %v866, %v992
        %v994 = vpop.f32.mrf.mxu0
        %v995 = vadd.f32 %v866, %v994
        %996 = vmatprep.mubr.f32.mxu0 0.0
        %997 = vmatmul.mubr.f32.gmra.mxu0 %v900
        %v998 = vpop.f32.mrf.mxu0
        %v999 = vadd.f32 %v871, %v998
        %v1000 = vpop.f32.mrf.mxu0
        %v1001 = vadd.f32 %v871, %v1000
        %1002 = vmatprep.mubr.f32.mxu0 0.0
        %1003 = vmatmul.mubr.f32.gmra.mxu0 %v903
        %v1004 = vpop.f32.mrf.mxu0
        %v1005 = vadd.f32 %v876, %v1004
        %v1006 = vpop.f32.mrf.mxu0
        %v1007 = vadd.f32 %v876, %v1006
        %1008 = vmatprep.mubr.f32.mxu0 0.0
        %1009 = vmatmul.mubr.f32.gmra.mxu0 %v906
        %v1010 = vpop.f32.mrf.mxu0
        %v1011 = vadd.f32 %v881, %v1010
        %v1012 = vpop.f32.mrf.mxu0
        %v1013 = vadd.f32 %v881, %v1012
        %1014 = vmatprep.mubr.f32.mxu0 0.0
        %1015 = vmatmul.mubr.f32.gmra.mxu0 %v909
        %v1016 = vpop.f32.mrf.mxu0
        %v1017 = vadd.f32 %v886, %v1016
        %v1018 = vpop.f32.mrf.mxu0
        %v1019 = vadd.f32 %v886, %v1018
        %1020 = vmatprep.mubr.f32.mxu0 0.0
        %1021 = vmatmul.mubr.f32.gmra.mxu0 %v912
        %v1022 = vpop.f32.mrf.mxu0
        %v1023 = vadd.f32 %v891, %v1022
        %v1024 = vpop.f32.mrf.mxu0
        %v1025 = vadd.f32 %v891, %v1024
        %1026 = vdwg.mxu0
        %vm1027 = vcmp.gt.f32.partialorder %v987, 0.0
        %vm1028 = vcmp.gt.f32.partialorder %v989, 0.0
        %vm1029 = vcmp.gt.f32.partialorder %v993, 0.0
        %vm1030 = vcmp.gt.f32.partialorder %v995, 0.0
        %vm1031 = vcmp.gt.f32.partialorder %v999, 0.0
        %vm1032 = vcmp.gt.f32.partialorder %v1001, 0.0
        %vm1033 = vcmp.gt.f32.partialorder %v1005, 0.0
        %vm1034 = vcmp.gt.f32.partialorder %v1007, 0.0
        %vm1035 = vcmp.gt.f32.partialorder %v1011, 0.0
        %vm1036 = vcmp.gt.f32.partialorder %v1013, 0.0
        %vm1037 = vcmp.gt.f32.partialorder %v1017, 0.0
        %vm1038 = vcmp.gt.f32.partialorder %v1019, 0.0
        %vm1039 = vcmp.gt.f32.partialorder %v1023, 0.0
        %vm1040 = vcmp.gt.f32.partialorder %v1025, 0.0
        %v1041 = vsel %vm1027, 0.0, %v987
        %v1042 = vsel %vm1028, 0.0, %v989
        %v1043 = vsel %vm1029, 0.0, %v993
        %v1044 = vsel %vm1030, 0.0, %v995
        %v1045 = vsel %vm1031, 0.0, %v999
        %v1046 = vsel %vm1032, 0.0, %v1001
        %v1047 = vsel %vm1033, 0.0, %v1005
        %v1048 = vsel %vm1034, 0.0, %v1007
        %v1049 = vsel %vm1035, 0.0, %v1011
        %v1050 = vsel %vm1036, 0.0, %v1013
        %v1051 = vsel %vm1037, 0.0, %v1017
        %v1052 = vsel %vm1038, 0.0, %v1019
        %v1053 = vsel %vm1039, 0.0, %v1023
        %v1054 = vsel %vm1040, 0.0, %v1025
        %v1055 = vmul.f32 %v1041, 1.442695
        %v1056 = vpow.pop %v1055
        %v1057 = vmul.f32 %v1042, 1.442695
        %v1058 = vpow.pop %v1057
        %v1059 = vmul.f32 %v1043, 1.442695
        %v1060 = vpow.pop %v1059
        %v1061 = vmul.f32 %v1044, 1.442695
        %v1062 = vpow.pop %v1061
        %v1063 = vmul.f32 %v1045, 1.442695
        %v1064 = vpow.pop %v1063
        %v1065 = vmul.f32 %v1046, 1.442695
        %v1066 = vpow.pop %v1065
        %v1067 = vmul.f32 %v1047, 1.442695
        %v1068 = vpow.pop %v1067
        %v1069 = vmul.f32 %v1048, 1.442695
        %v1070 = vpow.pop %v1069
        %v1071 = vmul.f32 %v1049, 1.442695
        %v1072 = vpow.pop %v1071
        %v1073 = vmul.f32 %v1050, 1.442695
        %v1074 = vpow.pop %v1073
        %v1075 = vmul.f32 %v1051, 1.442695
        %v1076 = vpow.pop %v1075
        %v1077 = vmul.f32 %v1052, 1.442695
        %v1078 = vpow.pop %v1077
        %v1079 = vmul.f32 %v1053, 1.442695
        %v1080 = vpow.pop %v1079
        %v1081 = vmul.f32 %v1054, 1.442695
        %v1082 = vpow.pop %v1081
        %v1083 = vsub.f32 %v1056, 1.0
        %v1084 = vsub.f32 %v1058, 1.0
        %v1085 = vsub.f32 %v1060, 1.0
        %v1086 = vsub.f32 %v1062, 1.0
        %v1087 = vsub.f32 %v1064, 1.0
        %v1088 = vsub.f32 %v1066, 1.0
        %v1089 = vsub.f32 %v1068, 1.0
        %v1090 = vsub.f32 %v1070, 1.0
        %v1091 = vsub.f32 %v1072, 1.0
        %v1092 = vsub.f32 %v1074, 1.0
        %v1093 = vsub.f32 %v1076, 1.0
        %v1094 = vsub.f32 %v1078, 1.0
        %v1095 = vsub.f32 %v1080, 1.0
        %v1096 = vsub.f32 %v1082, 1.0
        %v1097 = vsel %vm1027, %v987, %v1083
        %v1098 = vsel %vm1028, %v989, %v1084
        %v1099 = vsel %vm1029, %v993, %v1085
        %v1100 = vsel %vm1030, %v995, %v1086
        %v1101 = vsel %vm1031, %v999, %v1087
        %v1102 = vsel %vm1032, %v1001, %v1088
        %v1103 = vsel %vm1033, %v1005, %v1089
        %v1104 = vsel %vm1034, %v1007, %v1090
        %v1105 = vsel %vm1035, %v1011, %v1091
        %v1106 = vsel %vm1036, %v1013, %v1092
        %v1107 = vsel %vm1037, %v1017, %v1093
        %v1108 = vsel %vm1038, %v1019, %v1094
        %v1109 = vsel %vm1039, %v1023, %v1095
        %v1110 = vsel %vm1040, %v1025, %v1096
        %s1111 = scalar_lea.vmem %s1, 320
        %v1112 = vld [vmem:[%s1111] sm:$0xff]
        %v1113 = vld [vmem:[%s1111 + $0x8] sm:$0xff]
        %v1114 = vld [vmem:[%s1111 + $0x10] sm:$0xff]
        %v1115 = vld [vmem:[%s1111 + $0x18] sm:$0xff]
        %v1116 = vld [vmem:[%s1111 + $0x20] sm:$0xff]
        %v1117 = vld [vmem:[%s1111 + $0x28] sm:$0xff]
        %v1118 = vld [vmem:[%s1111 + $0x30] sm:$0xff]
        %s1119 = scalar_lea.vmem %s2, 320
        %v1120 = vld [vmem:[%s1119] sm:$0xff]
        %v1121 = vld [vmem:[%s1119 + $0x8] sm:$0xff]
        %v1122 = vld [vmem:[%s1119 + $0x10] sm:$0xff]
        %v1123 = vld [vmem:[%s1119 + $0x18] sm:$0xff]
        %v1124 = vld [vmem:[%s1119 + $0x20] sm:$0xff]
        %v1125 = vld [vmem:[%s1119 + $0x28] sm:$0xff]
        %v1126 = vld [vmem:[%s1119 + $0x30] sm:$0xff]
        %1128 = vset.pattern.permute.xlu0 0
        %1129 = vperm.xlu0 %1128, %v1120
        %v1130 = vpop.permute.xlu0 %1129
        %1133 = vset.pattern.permute.xlu0 0
        %1134 = vperm.xlu0 %1133, %v1121
        %v1135 = vpop.permute.xlu0 %1134
        %1138 = vset.pattern.permute.xlu0 0
        %1139 = vperm.xlu0 %1138, %v1122
        %v1140 = vpop.permute.xlu0 %1139
        %1143 = vset.pattern.permute.xlu0 0
        %1144 = vperm.xlu0 %1143, %v1123
        %v1145 = vpop.permute.xlu0 %1144
        %1148 = vset.pattern.permute.xlu0 0
        %1149 = vperm.xlu0 %1148, %v1124
        %v1150 = vpop.permute.xlu0 %1149
        %1153 = vset.pattern.permute.xlu0 0
        %1154 = vperm.xlu0 %1153, %v1125
        %v1155 = vpop.permute.xlu0 %1154
        %1158 = vset.pattern.permute.xlu0 0
        %1159 = vperm.xlu0 %1158, %v1126
        %v1160 = vpop.permute.xlu0 %1159
        %v1163 = vsel %vm423, %v1112, 0
        %v1166 = vsel %vm423, %v1113, 0
        %v1169 = vsel %vm423, %v1114, 0
        %v1172 = vsel %vm423, %v1115, 0
        %v1175 = vsel %vm423, %v1116, 0
        %v1178 = vsel %vm423, %v1117, 0
        %v1181 = vsel %vm423, %v1118, 0
        %v1184 = vsel %vm445, %v1109, 0
        %v1187 = vsel %vm445, %v1110, 0
        %1189 = vmatprep.subr.mxu0 0.0
        %1190 = vmatpush1.msra.mxu0 0.0
        %1191 = vmatprep.subr.mxu0 0.0
        %1192 = vmatpush1.msra.mxu0 0.0
        %1193 = vmatprep.subr.mxu0 0.0
        %1194 = vmatpush1.msra.mxu0 0.0
        %1195 = vmatprep.subr.mxu0 0.0
        %1196 = vmatpush1.msra.mxu0 0.0
        %1197 = vmatprep.subr.mxu0 0.0
        %1198 = vmatpush1.msra.mxu0 0.0
        %1199 = vmatprep.subr.mxu0 0.0
        %1200 = vmatpush1.msra.mxu0 0.0
        %1201 = vmatprep.subr.mxu0 0.0
        %1202 = vmatpush1.msra.mxu0 0.0
        %1203 = vmatprep.subr.mxu0 0.0
        %1204 = vmatpush1.msra.mxu0 0.0
        %1205 = vmatprep.subr.mxu0 0.0
        %1206 = vmatpush1.msra.mxu0 0.0
        %1207 = vmatprep.subr.mxu0 %v1187
        %1208 = vmatpush1.msra.mxu0 %v1184
        %1209 = vmatprep.subr.mxu0 %v1108
        %1210 = vmatpush1.msra.mxu0 %v1107
        %1211 = vmatprep.subr.mxu0 %v1106
        %1212 = vmatpush1.msra.mxu0 %v1105
        %1213 = vmatprep.subr.mxu0 %v1104
        %1214 = vmatpush1.msra.mxu0 %v1103
        %1215 = vmatprep.subr.mxu0 %v1102
        %1216 = vmatpush1.msra.mxu0 %v1101
        %1217 = vmatprep.subr.mxu0 %v1100
        %1218 = vmatpush1.msra.mxu0 %v1099
        %1219 = vmatprep.subr.mxu0 %v1098
        %1220 = vmatpush1.msra.mxu0 %v1097
        %1221 = vmatprep.subr.mxu0 0.0
        %1222 = vmatpush2.msra.mxu0 0.0
        %1223 = vmatprep.subr.mxu0 0.0
        %1224 = vmatpush2.msra.mxu0 0.0
        %1225 = vmatprep.subr.mxu0 0.0
        %1226 = vmatpush2.msra.mxu0 0.0
        %1227 = vmatprep.subr.mxu0 0.0
        %1228 = vmatpush2.msra.mxu0 0.0
        %1229 = vmatprep.subr.mxu0 0.0
        %1230 = vmatpush2.msra.mxu0 0.0
        %1231 = vmatprep.subr.mxu0 0.0
        %1232 = vmatpush2.msra.mxu0 0.0
        %1233 = vmatprep.subr.mxu0 0.0
        %1234 = vmatpush2.msra.mxu0 0.0
        %1235 = vmatprep.subr.mxu0 0.0
        %1236 = vmatpush2.msra.mxu0 0.0
        %1237 = vmatprep.subr.mxu0 0.0
        %1238 = vmatpush2.msra.mxu0 0.0
        %1239 = vmatprep.subr.mxu0 0.0
        %1240 = vmatpush2.msra.mxu0 0.0
        %1241 = vmatprep.subr.mxu0 0.0
        %1242 = vmatpush2.msra.mxu0 0.0
        %1243 = vmatprep.subr.mxu0 0.0
        %1244 = vmatpush2.msra.mxu0 0.0
        %1245 = vmatprep.subr.mxu0 0.0
        %1246 = vmatpush2.msra.mxu0 0.0
        %1247 = vmatprep.subr.mxu0 0.0
        %1248 = vmatpush2.msra.mxu0 0.0
        %1249 = vmatprep.subr.mxu0 0.0
        %1250 = vmatpush2.msra.mxu0 0.0
        %1251 = vmatprep.subr.mxu0 0.0
        %1252 = vmatpush2.msra.mxu0 0.0
        %1253 = vmatprep.mubr.f32.mxu0 0.0
        %1254 = vmatmul.mubr.f32.gmra.mxu0 %v1163
        %v1255 = vpop.f32.mrf.mxu0
        %v1256 = vadd.f32 %v1130, %v1255
        %v1257 = vpop.f32.mrf.mxu0
        %v1258 = vadd.f32 %v1130, %v1257
        %1259 = vmatprep.mubr.f32.mxu0 0.0
        %1260 = vmatmul.mubr.f32.gmra.mxu0 %v1166
        %v1261 = vpop.f32.mrf.mxu0
        %v1262 = vadd.f32 %v1135, %v1261
        %v1263 = vpop.f32.mrf.mxu0
        %v1264 = vadd.f32 %v1135, %v1263
        %1265 = vmatprep.mubr.f32.mxu0 0.0
        %1266 = vmatmul.mubr.f32.gmra.mxu0 %v1169
        %v1267 = vpop.f32.mrf.mxu0
        %v1268 = vadd.f32 %v1140, %v1267
        %v1269 = vpop.f32.mrf.mxu0
        %v1270 = vadd.f32 %v1140, %v1269
        %1271 = vmatprep.mubr.f32.mxu0 0.0
        %1272 = vmatmul.mubr.f32.gmra.mxu0 %v1172
        %v1273 = vpop.f32.mrf.mxu0
        %v1274 = vadd.f32 %v1145, %v1273
        %v1275 = vpop.f32.mrf.mxu0
        %v1276 = vadd.f32 %v1145, %v1275
        %1277 = vmatprep.mubr.f32.mxu0 0.0
        %1278 = vmatmul.mubr.f32.gmra.mxu0 %v1175
        %v1279 = vpop.f32.mrf.mxu0
        %v1280 = vadd.f32 %v1150, %v1279
        %v1281 = vpop.f32.mrf.mxu0
        %v1282 = vadd.f32 %v1150, %v1281
        %1283 = vmatprep.mubr.f32.mxu0 0.0
        %1284 = vmatmul.mubr.f32.gmra.mxu0 %v1178
        %v1285 = vpop.f32.mrf.mxu0
        %v1286 = vadd.f32 %v1155, %v1285
        %v1287 = vpop.f32.mrf.mxu0
        %v1288 = vadd.f32 %v1155, %v1287
        %1289 = vmatprep.mubr.f32.mxu0 0.0
        %1290 = vmatmul.mubr.f32.gmra.mxu0 %v1181
        %v1291 = vpop.f32.mrf.mxu0
        %v1292 = vadd.f32 %v1160, %v1291
        %v1293 = vpop.f32.mrf.mxu0
        %v1294 = vadd.f32 %v1160, %v1293
        %1295 = vdwg.mxu0
        %v1296 = vtanh.pop %v1256
        %v1297 = vtanh.pop %v1258
        %v1298 = vtanh.pop %v1262
        %v1299 = vtanh.pop %v1264
        %v1300 = vtanh.pop %v1268
        %v1301 = vtanh.pop %v1270
        %v1302 = vtanh.pop %v1274
        %v1303 = vtanh.pop %v1276
        %v1304 = vtanh.pop %v1280
        %v1305 = vtanh.pop %v1282
        %v1306 = vtanh.pop %v1286
        %v1307 = vtanh.pop %v1288
        %v1308 = vtanh.pop %v1292
        %v1309 = vtanh.pop %v1294
        %s1310 = scalar_lea.vmem %s1, 400
        %v1311 = vld [vmem:[%s1310] sm:$0xff]
        %v1312 = vld [vmem:[%s1310 + $0x8] sm:$0xff]
        %v1313 = vld [vmem:[%s1310 + $0x10] sm:$0xff]
        %v1314 = vld [vmem:[%s1310 + $0x18] sm:$0xff]
        %v1315 = vld [vmem:[%s1310 + $0x20] sm:$0xff]
        %v1316 = vld [vmem:[%s1310 + $0x28] sm:$0xff]
        %v1317 = vld [vmem:[%s1310 + $0x30] sm:$0xff]
        %s1318 = scalar_lea.vmem %s2, 400
        %v1319 = vld [vmem:[%s1318] sm:$0xff]
        %v1320 = vld [vmem:[%s1318 + $0x8] sm:$0xff]
        %v1321 = vld [vmem:[%s1318 + $0x10] sm:$0xff]
        %v1322 = vld [vmem:[%s1318 + $0x18] sm:$0xff]
        %v1323 = vld [vmem:[%s1318 + $0x20] sm:$0xff]
        %v1324 = vld [vmem:[%s1318 + $0x28] sm:$0xff]
        %v1325 = vld [vmem:[%s1318 + $0x30] sm:$0xff]
        %1327 = vset.pattern.permute.xlu0 0
        %1328 = vperm.xlu0 %1327, %v1319
        %v1329 = vpop.permute.xlu0 %1328
        %1332 = vset.pattern.permute.xlu0 0
        %1333 = vperm.xlu0 %1332, %v1320
        %v1334 = vpop.permute.xlu0 %1333
        %1337 = vset.pattern.permute.xlu0 0
        %1338 = vperm.xlu0 %1337, %v1321
        %v1339 = vpop.permute.xlu0 %1338
        %1342 = vset.pattern.permute.xlu0 0
        %1343 = vperm.xlu0 %1342, %v1322
        %v1344 = vpop.permute.xlu0 %1343
        %1347 = vset.pattern.permute.xlu0 0
        %1348 = vperm.xlu0 %1347, %v1323
        %v1349 = vpop.permute.xlu0 %1348
        %1352 = vset.pattern.permute.xlu0 0
        %1353 = vperm.xlu0 %1352, %v1324
        %v1354 = vpop.permute.xlu0 %1353
        %1357 = vset.pattern.permute.xlu0 0
        %1358 = vperm.xlu0 %1357, %v1325
        %v1359 = vpop.permute.xlu0 %1358
        %v1362 = vsel %vm423, %v1311, 0
        %v1365 = vsel %vm423, %v1312, 0
        %v1368 = vsel %vm423, %v1313, 0
        %v1371 = vsel %vm423, %v1314, 0
        %v1374 = vsel %vm423, %v1315, 0
        %v1377 = vsel %vm423, %v1316, 0
        %v1380 = vsel %vm423, %v1317, 0
        %v1383 = vsel %vm445, %v1308, 0
        %v1386 = vsel %vm445, %v1309, 0
        %1388 = vmatprep.subr.mxu0 0.0
        %1389 = vmatpush1.msra.mxu0 0.0
        %1390 = vmatprep.subr.mxu0 0.0
        %1391 = vmatpush1.msra.mxu0 0.0
        %1392 = vmatprep.subr.mxu0 0.0
        %1393 = vmatpush1.msra.mxu0 0.0
        %1394 = vmatprep.subr.mxu0 0.0
        %1395 = vmatpush1.msra.mxu0 0.0
        %1396 = vmatprep.subr.mxu0 0.0
        %1397 = vmatpush1.msra.mxu0 0.0
        %1398 = vmatprep.subr.mxu0 0.0
        %1399 = vmatpush1.msra.mxu0 0.0
        %1400 = vmatprep.subr.mxu0 0.0
        %1401 = vmatpush1.msra.mxu0 0.0
        %1402 = vmatprep.subr.mxu0 0.0
        %1403 = vmatpush1.msra.mxu0 0.0
        %1404 = vmatprep.subr.mxu0 0.0
        %1405 = vmatpush1.msra.mxu0 0.0
        %1406 = vmatprep.subr.mxu0 %v1386
        %1407 = vmatpush1.msra.mxu0 %v1383
        %1408 = vmatprep.subr.mxu0 %v1307
        %1409 = vmatpush1.msra.mxu0 %v1306
        %1410 = vmatprep.subr.mxu0 %v1305
        %1411 = vmatpush1.msra.mxu0 %v1304
        %1412 = vmatprep.subr.mxu0 %v1303
        %1413 = vmatpush1.msra.mxu0 %v1302
        %1414 = vmatprep.subr.mxu0 %v1301
        %1415 = vmatpush1.msra.mxu0 %v1300
        %1416 = vmatprep.subr.mxu0 %v1299
        %1417 = vmatpush1.msra.mxu0 %v1298
        %1418 = vmatprep.subr.mxu0 %v1297
        %1419 = vmatpush1.msra.mxu0 %v1296
        %1420 = vmatprep.subr.mxu0 0.0
        %1421 = vmatpush2.msra.mxu0 0.0
        %1422 = vmatprep.subr.mxu0 0.0
        %1423 = vmatpush2.msra.mxu0 0.0
        %1424 = vmatprep.subr.mxu0 0.0
        %1425 = vmatpush2.msra.mxu0 0.0
        %1426 = vmatprep.subr.mxu0 0.0
        %1427 = vmatpush2.msra.mxu0 0.0
        %1428 = vmatprep.subr.mxu0 0.0
        %1429 = vmatpush2.msra.mxu0 0.0
        %1430 = vmatprep.subr.mxu0 0.0
        %1431 = vmatpush2.msra.mxu0 0.0
        %1432 = vmatprep.subr.mxu0 0.0
        %1433 = vmatpush2.msra.mxu0 0.0
        %1434 = vmatprep.subr.mxu0 0.0
        %1435 = vmatpush2.msra.mxu0 0.0
        %1436 = vmatprep.subr.mxu0 0.0
        %1437 = vmatpush2.msra.mxu0 0.0
        %1438 = vmatprep.subr.mxu0 0.0
        %1439 = vmatpush2.msra.mxu0 0.0
        %1440 = vmatprep.subr.mxu0 0.0
        %1441 = vmatpush2.msra.mxu0 0.0
        %1442 = vmatprep.subr.mxu0 0.0
        %1443 = vmatpush2.msra.mxu0 0.0
        %1444 = vmatprep.subr.mxu0 0.0
        %1445 = vmatpush2.msra.mxu0 0.0
        %1446 = vmatprep.subr.mxu0 0.0
        %1447 = vmatpush2.msra.mxu0 0.0
        %1448 = vmatprep.subr.mxu0 0.0
        %1449 = vmatpush2.msra.mxu0 0.0
        %1450 = vmatprep.subr.mxu0 0.0
        %1451 = vmatpush2.msra.mxu0 0.0
        %1452 = vmatprep.mubr.f32.mxu0 0.0
        %1453 = vmatmul.mubr.f32.gmra.mxu0 %v1362
        %v1454 = vpop.f32.mrf.mxu0
        %v1455 = vadd.f32 %v1329, %v1454
        %v1456 = vpop.f32.mrf.mxu0
        %v1457 = vadd.f32 %v1329, %v1456
        %1458 = vmatprep.mubr.f32.mxu0 0.0
        %1459 = vmatmul.mubr.f32.gmra.mxu0 %v1365
        %v1460 = vpop.f32.mrf.mxu0
        %v1461 = vadd.f32 %v1334, %v1460
        %v1462 = vpop.f32.mrf.mxu0
        %v1463 = vadd.f32 %v1334, %v1462
        %1464 = vmatprep.mubr.f32.mxu0 0.0
        %1465 = vmatmul.mubr.f32.gmra.mxu0 %v1368
        %v1466 = vpop.f32.mrf.mxu0
        %v1467 = vadd.f32 %v1339, %v1466
        %v1468 = vpop.f32.mrf.mxu0
        %v1469 = vadd.f32 %v1339, %v1468
        %1470 = vmatprep.mubr.f32.mxu0 0.0
        %1471 = vmatmul.mubr.f32.gmra.mxu0 %v1371
        %v1472 = vpop.f32.mrf.mxu0
        %v1473 = vadd.f32 %v1344, %v1472
        %v1474 = vpop.f32.mrf.mxu0
        %v1475 = vadd.f32 %v1344, %v1474
        %1476 = vmatprep.mubr.f32.mxu0 0.0
        %1477 = vmatmul.mubr.f32.gmra.mxu0 %v1374
        %v1478 = vpop.f32.mrf.mxu0
        %v1479 = vadd.f32 %v1349, %v1478
        %v1480 = vpop.f32.mrf.mxu0
        %v1481 = vadd.f32 %v1349, %v1480
        %1482 = vmatprep.mubr.f32.mxu0 0.0
        %1483 = vmatmul.mubr.f32.gmra.mxu0 %v1377
        %v1484 = vpop.f32.mrf.mxu0
        %v1485 = vadd.f32 %v1354, %v1484
        %v1486 = vpop.f32.mrf.mxu0
        %v1487 = vadd.f32 %v1354, %v1486
        %1488 = vmatprep.mubr.f32.mxu0 0.0
        %1489 = vmatmul.mubr.f32.gmra.mxu0 %v1380
        %v1490 = vpop.f32.mrf.mxu0
        %v1491 = vadd.f32 %v1359, %v1490
        %v1492 = vpop.f32.mrf.mxu0
        %v1493 = vadd.f32 %v1359, %v1492
        %1494 = vdwg.mxu0
        %vm1495 = vcmp.gt.f32.partialorder %v1455, 0.0
        %vm1496 = vcmp.gt.f32.partialorder %v1457, 0.0
        %vm1497 = vcmp.gt.f32.partialorder %v1461, 0.0
        %vm1498 = vcmp.gt.f32.partialorder %v1463, 0.0
        %vm1499 = vcmp.gt.f32.partialorder %v1467, 0.0
        %vm1500 = vcmp.gt.f32.partialorder %v1469, 0.0
        %vm1501 = vcmp.gt.f32.partialorder %v1473, 0.0
        %vm1502 = vcmp.gt.f32.partialorder %v1475, 0.0
        %vm1503 = vcmp.gt.f32.partialorder %v1479, 0.0
        %vm1504 = vcmp.gt.f32.partialorder %v1481, 0.0
        %vm1505 = vcmp.gt.f32.partialorder %v1485, 0.0
        %vm1506 = vcmp.gt.f32.partialorder %v1487, 0.0
        %vm1507 = vcmp.gt.f32.partialorder %v1491, 0.0
        %vm1508 = vcmp.gt.f32.partialorder %v1493, 0.0
        %v1509 = vsel %vm1495, 0.0, %v1455
        %v1510 = vsel %vm1496, 0.0, %v1457
        %v1511 = vsel %vm1497, 0.0, %v1461
        %v1512 = vsel %vm1498, 0.0, %v1463
        %v1513 = vsel %vm1499, 0.0, %v1467
        %v1514 = vsel %vm1500, 0.0, %v1469
        %v1515 = vsel %vm1501, 0.0, %v1473
        %v1516 = vsel %vm1502, 0.0, %v1475
        %v1517 = vsel %vm1503, 0.0, %v1479
        %v1518 = vsel %vm1504, 0.0, %v1481
        %v1519 = vsel %vm1505, 0.0, %v1485
        %v1520 = vsel %vm1506, 0.0, %v1487
        %v1521 = vsel %vm1507, 0.0, %v1491
        %v1522 = vsel %vm1508, 0.0, %v1493
        %v1523 = vmul.f32 %v1509, 1.442695
        %v1524 = vpow.pop %v1523
        %v1525 = vmul.f32 %v1510, 1.442695
        %v1526 = vpow.pop %v1525
        %v1527 = vmul.f32 %v1511, 1.442695
        %v1528 = vpow.pop %v1527
        %v1529 = vmul.f32 %v1512, 1.442695
        %v1530 = vpow.pop %v1529
        %v1531 = vmul.f32 %v1513, 1.442695
        %v1532 = vpow.pop %v1531
        %v1533 = vmul.f32 %v1514, 1.442695
        %v1534 = vpow.pop %v1533
        %v1535 = vmul.f32 %v1515, 1.442695
        %v1536 = vpow.pop %v1535
        %v1537 = vmul.f32 %v1516, 1.442695
        %v1538 = vpow.pop %v1537
        %v1539 = vmul.f32 %v1517, 1.442695
        %v1540 = vpow.pop %v1539
        %v1541 = vmul.f32 %v1518, 1.442695
        %v1542 = vpow.pop %v1541
        %v1543 = vmul.f32 %v1519, 1.442695
        %v1544 = vpow.pop %v1543
        %v1545 = vmul.f32 %v1520, 1.442695
        %v1546 = vpow.pop %v1545
        %v1547 = vmul.f32 %v1521, 1.442695
        %v1548 = vpow.pop %v1547
        %v1549 = vmul.f32 %v1522, 1.442695
        %v1550 = vpow.pop %v1549
        %v1551 = vsub.f32 %v1524, 1.0
        %v1552 = vsub.f32 %v1526, 1.0
        %v1553 = vsub.f32 %v1528, 1.0
        %v1554 = vsub.f32 %v1530, 1.0
        %v1555 = vsub.f32 %v1532, 1.0
        %v1556 = vsub.f32 %v1534, 1.0
        %v1557 = vsub.f32 %v1536, 1.0
        %v1558 = vsub.f32 %v1538, 1.0
        %v1559 = vsub.f32 %v1540, 1.0
        %v1560 = vsub.f32 %v1542, 1.0
        %v1561 = vsub.f32 %v1544, 1.0
        %v1562 = vsub.f32 %v1546, 1.0
        %v1563 = vsub.f32 %v1548, 1.0
        %v1564 = vsub.f32 %v1550, 1.0
        %v1565 = vsel %vm1495, %v1455, %v1551
        %v1566 = vsel %vm1496, %v1457, %v1552
        %v1567 = vsel %vm1497, %v1461, %v1553
        %v1568 = vsel %vm1498, %v1463, %v1554
        %v1569 = vsel %vm1499, %v1467, %v1555
        %v1570 = vsel %vm1500, %v1469, %v1556
        %v1571 = vsel %vm1501, %v1473, %v1557
        %v1572 = vsel %vm1502, %v1475, %v1558
        %v1573 = vsel %vm1503, %v1479, %v1559
        %v1574 = vsel %vm1504, %v1481, %v1560
        %v1575 = vsel %vm1505, %v1485, %v1561
        %v1576 = vsel %vm1506, %v1487, %v1562
        %v1577 = vsel %vm1507, %v1491, %v1563
        %v1578 = vsel %vm1508, %v1493, %v1564
        %s1579 = scalar_lea.vmem %s1, 480
        %v1580 = vld [vmem:[%s1579] sm:$0xff]
        %v1581 = vld [vmem:[%s1579 + $0x8] sm:$0xff]
        %v1582 = vld [vmem:[%s1579 + $0x10] sm:$0xff]
        %v1583 = vld [vmem:[%s1579 + $0x18] sm:$0xff]
        %v1584 = vld [vmem:[%s1579 + $0x20] sm:$0xff]
        %v1585 = vld [vmem:[%s1579 + $0x28] sm:$0xff]
        %v1586 = vld [vmem:[%s1579 + $0x30] sm:$0xff]
        %v1587 = vld [vmem:[%s1579 + $0x38] sm:$0xff]
        %v1588 = vld [vmem:[%s1579 + $0x40] sm:$0xff]
        %v1589 = vld [vmem:[%s1579 + $0x48] sm:$0xff]
        %s1590 = scalar_lea.vmem %s2, 480
        %v1591 = vld [vmem:[%s1590] sm:$0xff]
        %v1592 = vld [vmem:[%s1590 + $0x8] sm:$0xff]
        %v1593 = vld [vmem:[%s1590 + $0x10] sm:$0xff]
        %v1594 = vld [vmem:[%s1590 + $0x18] sm:$0xff]
        %v1595 = vld [vmem:[%s1590 + $0x20] sm:$0xff]
        %v1596 = vld [vmem:[%s1590 + $0x28] sm:$0xff]
        %v1597 = vld [vmem:[%s1590 + $0x30] sm:$0xff]
        %v1598 = vld [vmem:[%s1590 + $0x38] sm:$0xff]
        %v1599 = vld [vmem:[%s1590 + $0x40] sm:$0xff]
        %v1600 = vld [vmem:[%s1590 + $0x48] sm:$0xff]
        %1602 = vset.pattern.permute.xlu0 0
        %1603 = vperm.xlu0 %1602, %v1591
        %v1604 = vpop.permute.xlu0 %1603
        %1607 = vset.pattern.permute.xlu0 0
        %1608 = vperm.xlu0 %1607, %v1592
        %v1609 = vpop.permute.xlu0 %1608
        %1612 = vset.pattern.permute.xlu0 0
        %1613 = vperm.xlu0 %1612, %v1593
        %v1614 = vpop.permute.xlu0 %1613
        %1617 = vset.pattern.permute.xlu0 0
        %1618 = vperm.xlu0 %1617, %v1594
        %v1619 = vpop.permute.xlu0 %1618
        %1622 = vset.pattern.permute.xlu0 0
        %1623 = vperm.xlu0 %1622, %v1595
        %v1624 = vpop.permute.xlu0 %1623
        %1627 = vset.pattern.permute.xlu0 0
        %1628 = vperm.xlu0 %1627, %v1596
        %v1629 = vpop.permute.xlu0 %1628
        %1632 = vset.pattern.permute.xlu0 0
        %1633 = vperm.xlu0 %1632, %v1597
        %v1634 = vpop.permute.xlu0 %1633
        %1637 = vset.pattern.permute.xlu0 0
        %1638 = vperm.xlu0 %1637, %v1598
        %v1639 = vpop.permute.xlu0 %1638
        %1642 = vset.pattern.permute.xlu0 0
        %1643 = vperm.xlu0 %1642, %v1599
        %v1644 = vpop.permute.xlu0 %1643
        %1647 = vset.pattern.permute.xlu0 0
        %1648 = vperm.xlu0 %1647, %v1600
        %v1649 = vpop.permute.xlu0 %1648
        %v1652 = vsel %vm423, %v1580, 0
        %v1655 = vsel %vm423, %v1581, 0
        %v1658 = vsel %vm423, %v1582, 0
        %v1661 = vsel %vm423, %v1583, 0
        %v1664 = vsel %vm423, %v1584, 0
        %v1667 = vsel %vm423, %v1585, 0
        %v1670 = vsel %vm423, %v1586, 0
        %v1673 = vsel %vm423, %v1587, 0
        %v1676 = vsel %vm423, %v1588, 0
        %v1679 = vsel %vm423, %v1589, 0
        %v1682 = vsel %vm445, %v1577, 0
        %v1685 = vsel %vm445, %v1578, 0
        %1687 = vmatprep.subr.mxu0 0.0
        %1688 = vmatpush1.msra.mxu0 0.0
        %1689 = vmatprep.subr.mxu0 0.0
        %1690 = vmatpush1.msra.mxu0 0.0
        %1691 = vmatprep.subr.mxu0 0.0
        %1692 = vmatpush1.msra.mxu0 0.0
        %1693 = vmatprep.subr.mxu0 0.0
        %1694 = vmatpush1.msra.mxu0 0.0
        %1695 = vmatprep.subr.mxu0 0.0
        %1696 = vmatpush1.msra.mxu0 0.0
        %1697 = vmatprep.subr.mxu0 0.0
        %1698 = vmatpush1.msra.mxu0 0.0
        %1699 = vmatprep.subr.mxu0 0.0
        %1700 = vmatpush1.msra.mxu0 0.0
        %1701 = vmatprep.subr.mxu0 0.0
        %1702 = vmatpush1.msra.mxu0 0.0
        %1703 = vmatprep.subr.mxu0 0.0
        %1704 = vmatpush1.msra.mxu0 0.0
        %1705 = vmatprep.subr.mxu0 %v1685
        %1706 = vmatpush1.msra.mxu0 %v1682
        %1707 = vmatprep.subr.mxu0 %v1576
        %1708 = vmatpush1.msra.mxu0 %v1575
        %1709 = vmatprep.subr.mxu0 %v1574
        %1710 = vmatpush1.msra.mxu0 %v1573
        %1711 = vmatprep.subr.mxu0 %v1572
        %1712 = vmatpush1.msra.mxu0 %v1571
        %1713 = vmatprep.subr.mxu0 %v1570
        %1714 = vmatpush1.msra.mxu0 %v1569
        %1715 = vmatprep.subr.mxu0 %v1568
        %1716 = vmatpush1.msra.mxu0 %v1567
        %1717 = vmatprep.subr.mxu0 %v1566
        %1718 = vmatpush1.msra.mxu0 %v1565
        %1719 = vmatprep.subr.mxu0 0.0
        %1720 = vmatpush2.msra.mxu0 0.0
        %1721 = vmatprep.subr.mxu0 0.0
        %1722 = vmatpush2.msra.mxu0 0.0
        %1723 = vmatprep.subr.mxu0 0.0
        %1724 = vmatpush2.msra.mxu0 0.0
        %1725 = vmatprep.subr.mxu0 0.0
        %1726 = vmatpush2.msra.mxu0 0.0
        %1727 = vmatprep.subr.mxu0 0.0
        %1728 = vmatpush2.msra.mxu0 0.0
        %1729 = vmatprep.subr.mxu0 0.0
        %1730 = vmatpush2.msra.mxu0 0.0
        %1731 = vmatprep.subr.mxu0 0.0
        %1732 = vmatpush2.msra.mxu0 0.0
        %1733 = vmatprep.subr.mxu0 0.0
        %1734 = vmatpush2.msra.mxu0 0.0
        %1735 = vmatprep.subr.mxu0 0.0
        %1736 = vmatpush2.msra.mxu0 0.0
        %1737 = vmatprep.subr.mxu0 0.0
        %1738 = vmatpush2.msra.mxu0 0.0
        %1739 = vmatprep.subr.mxu0 0.0
        %1740 = vmatpush2.msra.mxu0 0.0
        %1741 = vmatprep.subr.mxu0 0.0
        %1742 = vmatpush2.msra.mxu0 0.0
        %1743 = vmatprep.subr.mxu0 0.0
        %1744 = vmatpush2.msra.mxu0 0.0
        %1745 = vmatprep.subr.mxu0 0.0
        %1746 = vmatpush2.msra.mxu0 0.0
        %1747 = vmatprep.subr.mxu0 0.0
        %1748 = vmatpush2.msra.mxu0 0.0
        %1749 = vmatprep.subr.mxu0 0.0
        %1750 = vmatpush2.msra.mxu0 0.0
        %1751 = vmatprep.mubr.f32.mxu0 0.0
        %1752 = vmatmul.mubr.f32.gmra.mxu0 %v1652
        %v1753 = vpop.f32.mrf.mxu0
        %v1754 = vadd.f32 %v1604, %v1753
        %v1755 = vpop.f32.mrf.mxu0
        %v1756 = vadd.f32 %v1604, %v1755
        %1757 = vmatprep.mubr.f32.mxu0 0.0
        %1758 = vmatmul.mubr.f32.gmra.mxu0 %v1655
        %v1759 = vpop.f32.mrf.mxu0
        %v1760 = vadd.f32 %v1609, %v1759
        %v1761 = vpop.f32.mrf.mxu0
        %v1762 = vadd.f32 %v1609, %v1761
        %1763 = vmatprep.mubr.f32.mxu0 0.0
        %1764 = vmatmul.mubr.f32.gmra.mxu0 %v1658
        %v1765 = vpop.f32.mrf.mxu0
        %v1766 = vadd.f32 %v1614, %v1765
        %v1767 = vpop.f32.mrf.mxu0
        %v1768 = vadd.f32 %v1614, %v1767
        %1769 = vmatprep.mubr.f32.mxu0 0.0
        %1770 = vmatmul.mubr.f32.gmra.mxu0 %v1661
        %v1771 = vpop.f32.mrf.mxu0
        %v1772 = vadd.f32 %v1619, %v1771
        %v1773 = vpop.f32.mrf.mxu0
        %v1774 = vadd.f32 %v1619, %v1773
        %1775 = vmatprep.mubr.f32.mxu0 0.0
        %1776 = vmatmul.mubr.f32.gmra.mxu0 %v1664
        %v1777 = vpop.f32.mrf.mxu0
        %v1778 = vadd.f32 %v1624, %v1777
        %v1779 = vpop.f32.mrf.mxu0
        %v1780 = vadd.f32 %v1624, %v1779
        %1781 = vmatprep.mubr.f32.mxu0 0.0
        %1782 = vmatmul.mubr.f32.gmra.mxu0 %v1667
        %v1783 = vpop.f32.mrf.mxu0
        %v1784 = vadd.f32 %v1629, %v1783
        %v1785 = vpop.f32.mrf.mxu0
        %v1786 = vadd.f32 %v1629, %v1785
        %1787 = vmatprep.mubr.f32.mxu0 0.0
        %1788 = vmatmul.mubr.f32.gmra.mxu0 %v1670
        %v1789 = vpop.f32.mrf.mxu0
        %v1790 = vadd.f32 %v1634, %v1789
        %v1791 = vpop.f32.mrf.mxu0
        %v1792 = vadd.f32 %v1634, %v1791
        %1793 = vmatprep.mubr.f32.mxu0 0.0
        %1794 = vmatmul.mubr.f32.gmra.mxu0 %v1673
        %v1795 = vpop.f32.mrf.mxu0
        %v1796 = vadd.f32 %v1639, %v1795
        %v1797 = vpop.f32.mrf.mxu0
        %v1798 = vadd.f32 %v1639, %v1797
        %1799 = vmatprep.mubr.f32.mxu0 0.0
        %1800 = vmatmul.mubr.f32.gmra.mxu0 %v1676
        %v1801 = vpop.f32.mrf.mxu0
        %v1802 = vadd.f32 %v1644, %v1801
        %v1803 = vpop.f32.mrf.mxu0
        %v1804 = vadd.f32 %v1644, %v1803
        %1805 = vmatprep.mubr.f32.mxu0 0.0
        %1806 = vmatmul.mubr.f32.gmra.mxu0 %v1679
        %v1807 = vpop.f32.mrf.mxu0
        %v1808 = vadd.f32 %v1649, %v1807
        %v1809 = vpop.f32.mrf.mxu0
        %v1810 = vadd.f32 %v1649, %v1809
        %1811 = vdwg.mxu0
        %1812 = vst [vmem:[%s164] sm:$0xff] %v1754
        %1813 = vst [vmem:[%s164 + $0x8] sm:$0xff] %v1756
        %1814 = vst [vmem:[%s164 + $0x10] sm:$0xff] %v1760
        %1815 = vst [vmem:[%s164 + $0x18] sm:$0xff] %v1762
        %1816 = vst [vmem:[%s164 + $0x20] sm:$0xff] %v1766
        %1817 = vst [vmem:[%s164 + $0x28] sm:$0xff] %v1768
        %1818 = vst [vmem:[%s164 + $0x30] sm:$0xff] %v1772
        %1819 = vst [vmem:[%s164 + $0x38] sm:$0xff] %v1774
        %1820 = vst [vmem:[%s164 + $0x40] sm:$0xff] %v1778
        %1821 = vst [vmem:[%s164 + $0x48] sm:$0xff] %v1780
        %1822 = vst [vmem:[%s164 + $0x50] sm:$0xff] %v1784
        %1823 = vst [vmem:[%s164 + $0x58] sm:$0xff] %v1786
        %1824 = vst [vmem:[%s164 + $0x60] sm:$0xff] %v1790
        %1825 = vst [vmem:[%s164 + $0x68] sm:$0xff] %v1792
        %1826 = vst [vmem:[%s164 + $0x70] sm:$0xff] %v1796
        %1827 = vst [vmem:[%s164 + $0x78] sm:$0xff] %v1798
        %1828 = vst [vmem:[%s164 + $0x80] sm:$0xff] %v1802
        %1829 = vst [vmem:[%s164 + $0x88] sm:$0xff] %v1804
        %1830 = vst [vmem:[%s164 + $0x90] sm:$0xff] %v1808
        %1831 = vst [vmem:[%s164 + $0x98] sm:$0xff] %v1810
        %s1832 = sand.u32 %s93, 1
        %s1833 = scalar_lea.sflag [#allocation3], %s1832
        %s1834 = sand.u32 %s93, 1
        %s1835 = smul.addr %s1834, 160
        %s1836 = scalar_lea.vmem [#allocation2], %s1835
        // Predicated region
        $region33: #{condensation_net_2_by_2.1} parent=31 // pred_check
          %p1837 = pneg %p103
        $region34: #{condensation_net_2_by_2.1} parent=31 // pred_check_branch
          %1839 = sbr.rel (%p1837) target = $region36
        $region35: #{condensation_net_2_by_2.1} parent=31 // pred_region
          %s1840 = smul.u32 2, %s17
          %s1842 = ssub.s32 2560, 2560
          %1843 = vsyncadd %s1833, %s1842
          %s1844 = smul.addr %s1840, 128
          %s1845 = scalar_lea.hbm %s3, %s1844
          %s1846 = sshll.u32 %s1836, 4
          %s1847 = int_to_ptr.vmem [resolvable:$true] %s1846
          %1852 = dma.vmem_to_hbm [thread:$0]  %s1847, 2560, %s1845, %s1833, 256, 512, 16
        $region36: #{condensation_net_2_by_2.1} parent=31 // pred_fallthru
          _
      $region32: #{condensation_net_2_by_2.1} parent=5 // pred_fallthru
        _
      %p1853 = scmp.le.s32.totalorder 2, %s12
      // Predicated region
      $region37: #{condensation_net_2_by_2.1} parent=5 // pred_check
        %p1854 = pneg %p1853
      $region38: #{condensation_net_2_by_2.1} parent=5 // pred_check_branch
        %1856 = sbr.rel (%p1854) target = $region40
      $region39: #{condensation_net_2_by_2.1} parent=5 // pred_region
        %s1857 = ssub.s32 %s12, 2
        // Predicated region
        $region41: #{condensation_net_2_by_2.1} parent=39 // pred_check
          %p1858 = pneg %p109
        $region42: #{condensation_net_2_by_2.1} parent=39 // pred_check_branch
          %1860 = sbr.rel (%p1858) target = $region44
        $region43: #{condensation_net_2_by_2.1} parent=39 // pred_region
          %s1861 = sand.u32 %s94, 1
          %s1862 = scalar_lea.sflag [#allocation3], %s1861
          %s1863 = sand.u32 %s94, 1
          %s1864 = smul.addr %s1863, 160
          %s1865 = scalar_lea.vmem [#allocation2], %s1864
          %1866 = dma.done %s1862, 2560
        $region44: #{condensation_net_2_by_2.1} parent=39 // pred_fallthru
          _
      $region40: #{condensation_net_2_by_2.1} parent=5 // pred_fallthru
        _
    $region6: #{condensation_net_2_by_2.1} parent=1 // loop_footer
      %s16 = sadd.s32 1, %s12
    $region7: #{condensation_net_2_by_2.1} parent=1 // loop_footer_branch
      %11 = sbr.rel target = $region3
    $region8: #{condensation_net_2_by_2.1} parent=1 // loop_exit
      _
    %1867 = vsyncpa [#allocation3], 1
    %s1868 = scalar_lea.sflag [#allocation3], 1
    %1869 = vsyncpa %s1868, 1

</llo_original>
